<compile_context>
chip_gen: v6e
topology: v6e:2x2x1
jax: 0.10.0
libtpu: 0.0.40
codegen_flags: <defaults>
</compile_context>

<pallas_src>
import functools

import jax
import jax.numpy as jnp
from jax.experimental import pallas as pl
from jax.experimental.pallas import tpu as pltpu

NEG_SLOPE = 0.1  # LeakyReLU(0.1)


def _leaky_relu(x):
    # max(x, 0.1*x) == LeakyReLU(0.1) for slope in (0, 1).
    return jnp.maximum(x, NEG_SLOPE * x)


def _round_up(x, m):
    return (x + m - 1) // m * m


def prometheus_kernel(x_ref, w_in_ref, b_in_ref, w_h_ref, b_h_ref,
                      w_out_ref, b_out_ref, out_ref):
    """One batch tile of the full forward pass.

    x_ref:     [TB, D_pad]            (batch tile)
    w_in_ref:  [D_pad, Hp],  b_in_ref: [1, Hp]
    w_h_ref:   [L, Hp, Hp],  b_h_ref:  [L, 1, Hp]
    w_out_ref: [8, Hp]  (row 0 = real output weights, rows 1-7 zero)
    b_out_ref: [1, 1]
    out_ref:   [8, TB]  (row 0 = real output, lane-dense)
    """
    # Input layer + activation.
    h = _leaky_relu(
        jnp.dot(x_ref[...], w_in_ref[...], preferred_element_type=jnp.float32)
        + b_in_ref[...]
    )

    # Hidden residual blocks (static unroll; L is small). Weights are read
    # per-layer from the ref so the full stack never lives in vregs at once.
    num_layers = w_h_ref.shape[0]
    for l in range(num_layers):
        h_new = _leaky_relu(
            jnp.dot(h, w_h_ref[l], preferred_element_type=jnp.float32)
            + b_h_ref[l]
        )
        h = h + h_new
        # Dropout(0.1) -> identity (eval mode).

    # Head projection, lane-dense: out[o, b] = sum_h w_out[o, h] * h[b, h].
    y = jax.lax.dot_general(
        w_out_ref[...], h,
        dimension_numbers=(((1,), (1,)), ((), ())),
        preferred_element_type=jnp.float32,
    )  # [8, TB]
    out_ref[...] = y + b_out_ref[...]


@functools.partial(jax.jit, static_argnames=("block_b",))
def prometheus_forward(x, w_in, b_in, w_h, b_h, w_out, b_out, *, block_b=512):
    """Pads/reshapes params, launches the batch-tiled kernel, strips padding."""
    B, d_in = x.shape
    L, H, _ = w_h.shape

    d_pad = _round_up(d_in, 8)       # contraction dim of the first matmul
    h_pad = _round_up(H, 128)        # lane-align the hidden width
    nb = pl.cdiv(B, block_b)
    b_pad = nb * block_b

    # Zero padding keeps the math exact (padded rows/cols contribute 0 and
    # stay 0 through LeakyReLU + residual adds).
    x_p = jnp.pad(x, ((0, b_pad - B), (0, d_pad - d_in)))
    w_in_p = jnp.pad(w_in, ((0, d_pad - d_in), (0, h_pad - H)))
    b_in_p = jnp.pad(b_in.reshape(1, H), ((0, 0), (0, h_pad - H)))
    w_h_p = jnp.pad(w_h, ((0, 0), (0, h_pad - H), (0, h_pad - H)))
    b_h_p = jnp.pad(b_h.reshape(L, 1, H), ((0, 0), (0, 0), (0, h_pad - H)))
    # [H, 1] -> lane-dense row [1, Hp] -> pad to 8 rows for an aligned matmul.
    w_out_p = jnp.pad(w_out.T, ((0, 7), (0, h_pad - H)))
    b_out_p = b_out.reshape(1, 1)

    grid_spec = pltpu.PrefetchScalarGridSpec(
        num_scalar_prefetch=0,
        grid=(nb,),
        in_specs=[
            pl.BlockSpec((block_b, d_pad), lambda i: (i, 0)),       # x (tiled)
            pl.BlockSpec((d_pad, h_pad), lambda i: (0, 0)),         # w_in
            pl.BlockSpec((1, h_pad), lambda i: (0, 0)),             # b_in
            pl.BlockSpec((L, h_pad, h_pad), lambda i: (0, 0, 0)),   # w_h
            pl.BlockSpec((L, 1, h_pad), lambda i: (0, 0, 0)),       # b_h
            pl.BlockSpec((8, h_pad), lambda i: (0, 0)),             # w_out
            pl.BlockSpec((1, 1), lambda i: (0, 0)),                 # b_out
        ],
        out_specs=pl.BlockSpec((8, block_b), lambda i: (i, 0)),
    )

    out = pl.pallas_call(
        prometheus_kernel,
        out_shape=jax.ShapeDtypeStruct((nb * 8, block_b), jnp.float32),
        grid_spec=grid_spec,
        compiler_params=pltpu.CompilerParams(
            dimension_semantics=("parallel",),
            vmem_limit_bytes=32 * 1024 * 1024,
        ),
    )(x_p, w_in_p, b_in_p, w_h_p, b_h_p, w_out_p, b_out_p)

    # Row 0 of each [8, TB] block holds the real values; strip batch padding.
    out = out.reshape(nb, 8, block_b)[:, 0, :].reshape(nb * block_b)[:B]
    return out.reshape(B, 1)


def init_params(key, input_dim, hidden_dim, layers):
    """Deterministic synthetic parameters (Linear weights stored [in, out])."""
    ks = jax.random.split(key, 6)
    s_in = 1.0 / jnp.sqrt(input_dim)
    s_h = 1.0 / jnp.sqrt(hidden_dim)
    w_in = jax.random.uniform(ks[0], (input_dim, hidden_dim), jnp.float32,
                              -s_in, s_in)
    b_in = jax.random.uniform(ks[1], (hidden_dim,), jnp.float32, -s_in, s_in)
    w_h = jax.random.uniform(ks[2], (layers, hidden_dim, hidden_dim),
                             jnp.float32, -s_h, s_h)
    b_h = jax.random.uniform(ks[3], (layers, hidden_dim), jnp.float32,
                             -s_h, s_h)
    w_out = jax.random.uniform(ks[4], (hidden_dim, 1), jnp.float32, -s_h, s_h)
    b_out = jax.random.uniform(ks[5], (1,), jnp.float32, -s_h, s_h)
    return w_in, b_in, w_h, b_h, w_out, b_out


def reference_forward(x, w_in, b_in, w_h, b_h, w_out, b_out):
    """Pure-JAX reference matching the PyTorch forward (eval mode)."""
    h = _leaky_relu(x @ w_in + b_in[None, :])
    for l in range(w_h.shape[0]):
        h_new = _leaky_relu(h @ w_h[l] + b_h[l][None, :])
        h = h + h_new
    return h @ w_out + b_out[None, :]


if __name__ == "__main__":
    # Module defaults: input_dim=5, hidden_dim=128, layers=4.
    B, INPUT_DIM, HIDDEN_DIM, LAYERS = 200, 5, 128, 4
    BLOCK_B = 128  # small tile so the 2-step grid (with batch padding) is exercised

    key = jax.random.PRNGKey(0)
    k_x, k_p = jax.random.split(key)
    x = jax.random.normal(k_x, (B, INPUT_DIM), jnp.float32)
    params = init_params(k_p, INPUT_DIM, HIDDEN_DIM, LAYERS)

    out = prometheus_forward(x, *params, block_b=BLOCK_B)
    out = jax.block_until_ready(out)

    ref = reference_forward(x, *params)
    assert out.shape == (B, 1), out.shape
    assert jnp.allclose(out, ref, atol=1e-4, rtol=1e-4), (
        f"max abs err {jnp.max(jnp.abs(out - ref))}"
    )
    print("KERNEL_OK")
</pallas_src>

<mosaic_0001>
module attributes {stable_mosaic.version = 11 : i64} {
  func.func @prometheus_kernel(%arg0: i32, %arg1: memref<128x8xf32, #tpu.memory_space<vmem>>, %arg2: memref<8x128xf32, #tpu.memory_space<vmem>>, %arg3: memref<1x128xf32, #tpu.memory_space<vmem>>, %arg4: memref<4x128x128xf32, #tpu.memory_space<vmem>>, %arg5: memref<4x1x128xf32, #tpu.memory_space<vmem>>, %arg6: memref<8x128xf32, #tpu.memory_space<vmem>>, %arg7: memref<1x1xf32, #tpu.memory_space<vmem>>, %arg8: memref<8x128xf32, #tpu.memory_space<vmem>>) attributes {dimension_semantics = [#tpu.dimension_semantics<parallel>], iteration_bounds = array<i64: 2>, scalar_prefetch = 0 : i64, scratch_operands = 0 : i64, tpu.core_type = #tpu.core_type<tc>, window_params = [{transform_indices = @transform_0, window_bounds = array<i64: 128, 8>}, {pipeline_mode = #tpu.pipeline_mode<synchronous>, transform_indices = @transform_1, window_bounds = array<i64: 8, 128>}, {pipeline_mode = #tpu.pipeline_mode<synchronous>, transform_indices = @transform_2, window_bounds = array<i64: 1, 128>}, {pipeline_mode = #tpu.pipeline_mode<synchronous>, transform_indices = @transform_3, window_bounds = array<i64: 4, 128, 128>}, {pipeline_mode = #tpu.pipeline_mode<synchronous>, transform_indices = @transform_4, window_bounds = array<i64: 4, 1, 128>}, {pipeline_mode = #tpu.pipeline_mode<synchronous>, transform_indices = @transform_5, window_bounds = array<i64: 8, 128>}, {pipeline_mode = #tpu.pipeline_mode<synchronous>, transform_indices = @transform_6, window_bounds = array<i64: 1, 1>}, {transform_indices = @transform_7, window_bounds = array<i64: 8, 128>}]} {
    %c0 = arith.constant 0 : index
    %c0_0 = arith.constant 0 : index
    %0 = vector.load %arg1[%c0, %c0_0] : memref<128x8xf32, #tpu.memory_space<vmem>>, vector<128x8xf32>
    %c0_1 = arith.constant 0 : index
    %c0_2 = arith.constant 0 : index
    %1 = vector.load %arg2[%c0_1, %c0_2] : memref<8x128xf32, #tpu.memory_space<vmem>>, vector<8x128xf32>
    %cst = arith.constant dense<0.000000e+00> : vector<128x128xf32>
    %2 = tpu.matmul %0, %1, %cst {dimension_numbers = #tpu.dot_dimension_numbers<[1], [0], [0], [1], [0, 0, 1, 1], [], []>} : vector<128x8xf32>, vector<8x128xf32>, vector<128x128xf32> -> vector<128x128xf32>
    %c0_3 = arith.constant 0 : index
    %c0_4 = arith.constant 0 : index
    %3 = vector.load %arg3[%c0_3, %c0_4] : memref<1x128xf32, #tpu.memory_space<vmem>>, vector<1x128xf32>
    %4 = vector.broadcast %3 : vector<1x128xf32> to vector<128x128xf32>
    %5 = arith.addf %2, %4 : vector<128x128xf32>
    %cst_5 = arith.constant 1.000000e-01 : f32
    %6 = vector.broadcast %cst_5 : f32 to vector<128x128xf32>
    %7 = arith.mulf %6, %5 : vector<128x128xf32>
    %8 = arith.maximumf %5, %7 : vector<128x128xf32>
    %c0_6 = arith.constant 0 : index
    %c0_7 = arith.constant 0 : index
    %c0_8 = arith.constant 0 : index
    %9 = vector.load %arg4[%c0_6, %c0_7, %c0_8] : memref<4x128x128xf32, #tpu.memory_space<vmem>>, vector<1x128x128xf32>
    %10 = vector.shape_cast %9 : vector<1x128x128xf32> to vector<128x128xf32>
    %cst_9 = arith.constant dense<0.000000e+00> : vector<128x128xf32>
    %11 = tpu.matmul %8, %10, %cst_9 {dimension_numbers = #tpu.dot_dimension_numbers<[1], [0], [0], [1], [0, 0, 1, 1], [], []>} : vector<128x128xf32>, vector<128x128xf32>, vector<128x128xf32> -> vector<128x128xf32>
    %c0_10 = arith.constant 0 : index
    %c0_11 = arith.constant 0 : index
    %c0_12 = arith.constant 0 : index
    %12 = vector.load %arg5[%c0_10, %c0_11, %c0_12] : memref<4x1x128xf32, #tpu.memory_space<vmem>>, vector<1x1x128xf32>
    %13 = vector.shape_cast %12 : vector<1x1x128xf32> to vector<1x128xf32>
    %14 = vector.broadcast %13 : vector<1x128xf32> to vector<128x128xf32>
    %15 = arith.addf %11, %14 : vector<128x128xf32>
    %cst_13 = arith.constant 1.000000e-01 : f32
    %16 = vector.broadcast %cst_13 : f32 to vector<128x128xf32>
    %17 = arith.mulf %16, %15 : vector<128x128xf32>
    %18 = arith.maximumf %15, %17 : vector<128x128xf32>
    %19 = arith.addf %8, %18 : vector<128x128xf32>
    %c1 = arith.constant 1 : index
    %c0_14 = arith.constant 0 : index
    %c0_15 = arith.constant 0 : index
    %20 = vector.load %arg4[%c1, %c0_14, %c0_15] : memref<4x128x128xf32, #tpu.memory_space<vmem>>, vector<1x128x128xf32>
    %21 = vector.shape_cast %20 : vector<1x128x128xf32> to vector<128x128xf32>
    %cst_16 = arith.constant dense<0.000000e+00> : vector<128x128xf32>
    %22 = tpu.matmul %19, %21, %cst_16 {dimension_numbers = #tpu.dot_dimension_numbers<[1], [0], [0], [1], [0, 0, 1, 1], [], []>} : vector<128x128xf32>, vector<128x128xf32>, vector<128x128xf32> -> vector<128x128xf32>
    %c1_17 = arith.constant 1 : index
    %c0_18 = arith.constant 0 : index
    %c0_19 = arith.constant 0 : index
    %23 = vector.load %arg5[%c1_17, %c0_18, %c0_19] : memref<4x1x128xf32, #tpu.memory_space<vmem>>, vector<1x1x128xf32>
    %24 = vector.shape_cast %23 : vector<1x1x128xf32> to vector<1x128xf32>
    %25 = vector.broadcast %24 : vector<1x128xf32> to vector<128x128xf32>
    %26 = arith.addf %22, %25 : vector<128x128xf32>
    %cst_20 = arith.constant 1.000000e-01 : f32
    %27 = vector.broadcast %cst_20 : f32 to vector<128x128xf32>
    %28 = arith.mulf %27, %26 : vector<128x128xf32>
    %29 = arith.maximumf %26, %28 : vector<128x128xf32>
    %30 = arith.addf %19, %29 : vector<128x128xf32>
    %c2 = arith.constant 2 : index
    %c0_21 = arith.constant 0 : index
    %c0_22 = arith.constant 0 : index
    %31 = vector.load %arg4[%c2, %c0_21, %c0_22] : memref<4x128x128xf32, #tpu.memory_space<vmem>>, vector<1x128x128xf32>
    %32 = vector.shape_cast %31 : vector<1x128x128xf32> to vector<128x128xf32>
    %cst_23 = arith.constant dense<0.000000e+00> : vector<128x128xf32>
    %33 = tpu.matmul %30, %32, %cst_23 {dimension_numbers = #tpu.dot_dimension_numbers<[1], [0], [0], [1], [0, 0, 1, 1], [], []>} : vector<128x128xf32>, vector<128x128xf32>, vector<128x128xf32> -> vector<128x128xf32>
    %c2_24 = arith.constant 2 : index
    %c0_25 = arith.constant 0 : index
    %c0_26 = arith.constant 0 : index
    %34 = vector.load %arg5[%c2_24, %c0_25, %c0_26] : memref<4x1x128xf32, #tpu.memory_space<vmem>>, vector<1x1x128xf32>
    %35 = vector.shape_cast %34 : vector<1x1x128xf32> to vector<1x128xf32>
    %36 = vector.broadcast %35 : vector<1x128xf32> to vector<128x128xf32>
    %37 = arith.addf %33, %36 : vector<128x128xf32>
    %cst_27 = arith.constant 1.000000e-01 : f32
    %38 = vector.broadcast %cst_27 : f32 to vector<128x128xf32>
    %39 = arith.mulf %38, %37 : vector<128x128xf32>
    %40 = arith.maximumf %37, %39 : vector<128x128xf32>
    %41 = arith.addf %30, %40 : vector<128x128xf32>
    %c3 = arith.constant 3 : index
    %c0_28 = arith.constant 0 : index
    %c0_29 = arith.constant 0 : index
    %42 = vector.load %arg4[%c3, %c0_28, %c0_29] : memref<4x128x128xf32, #tpu.memory_space<vmem>>, vector<1x128x128xf32>
    %43 = vector.shape_cast %42 : vector<1x128x128xf32> to vector<128x128xf32>
    %cst_30 = arith.constant dense<0.000000e+00> : vector<128x128xf32>
    %44 = tpu.matmul %41, %43, %cst_30 {dimension_numbers = #tpu.dot_dimension_numbers<[1], [0], [0], [1], [0, 0, 1, 1], [], []>} : vector<128x128xf32>, vector<128x128xf32>, vector<128x128xf32> -> vector<128x128xf32>
    %c3_31 = arith.constant 3 : index
    %c0_32 = arith.constant 0 : index
    %c0_33 = arith.constant 0 : index
    %45 = vector.load %arg5[%c3_31, %c0_32, %c0_33] : memref<4x1x128xf32, #tpu.memory_space<vmem>>, vector<1x1x128xf32>
    %46 = vector.shape_cast %45 : vector<1x1x128xf32> to vector<1x128xf32>
    %47 = vector.broadcast %46 : vector<1x128xf32> to vector<128x128xf32>
    %48 = arith.addf %44, %47 : vector<128x128xf32>
    %cst_34 = arith.constant 1.000000e-01 : f32
    %49 = vector.broadcast %cst_34 : f32 to vector<128x128xf32>
    %50 = arith.mulf %49, %48 : vector<128x128xf32>
    %51 = arith.maximumf %48, %50 : vector<128x128xf32>
    %52 = arith.addf %41, %51 : vector<128x128xf32>
    %c0_35 = arith.constant 0 : index
    %c0_36 = arith.constant 0 : index
    %53 = vector.load %arg6[%c0_35, %c0_36] : memref<8x128xf32, #tpu.memory_space<vmem>>, vector<8x128xf32>
    %cst_37 = arith.constant dense<0.000000e+00> : vector<8x128xf32>
    %54 = tpu.matmul %53, %52, %cst_37 {dimension_numbers = #tpu.dot_dimension_numbers<[1], [1], [0], [0], [0, 0, 1, 0], [], []>} : vector<8x128xf32>, vector<128x128xf32>, vector<8x128xf32> -> vector<8x128xf32>
    %c0_38 = arith.constant 0 : index
    %c0_39 = arith.constant 0 : index
    %55 = vector.load %arg7[%c0_38, %c0_39] : memref<1x1xf32, #tpu.memory_space<vmem>>, vector<1x1xf32>
    %56 = vector.broadcast %55 : vector<1x1xf32> to vector<8x128xf32>
    %57 = arith.addf %54, %56 : vector<8x128xf32>
    %c0_40 = arith.constant 0 : index
    %c0_41 = arith.constant 0 : index
    %58 = vector.load %arg8[%c0_40, %c0_41] : memref<8x128xf32, #tpu.memory_space<vmem>>, vector<8x128xf32>
    tpu.vector_store %arg8[%c0_40, %c0_41], %57 {strides = array<i32>} : memref<8x128xf32, #tpu.memory_space<vmem>>, vector<8x128xf32>,
    return
  }
  func.func @transform_0(%arg0: i32) -> (i32, i32) {
    %c0_i32 = arith.constant 0 : i32
    %c0_i32_0 = arith.constant 0 : i32
    return %arg0, %c0_i32 : i32, i32
  }
  func.func @transform_1(%arg0: i32) -> (i32, i32) {
    %c0_i32 = arith.constant 0 : i32
    %c0_i32_0 = arith.constant 0 : i32
    %c0_i32_1 = arith.constant 0 : i32
    return %c0_i32, %c0_i32_0 : i32, i32
  }
  func.func @transform_2(%arg0: i32) -> (i32, i32) {
    %c0_i32 = arith.constant 0 : i32
    %c0_i32_0 = arith.constant 0 : i32
    %c0_i32_1 = arith.constant 0 : i32
    return %c0_i32, %c0_i32_0 : i32, i32
  }
  func.func @transform_3(%arg0: i32) -> (i32, i32, i32) {
    %c0_i32 = arith.constant 0 : i32
    %c0_i32_0 = arith.constant 0 : i32
    %c0_i32_1 = arith.constant 0 : i32
    %c0_i32_2 = arith.constant 0 : i32
    return %c0_i32, %c0_i32_0, %c0_i32_1 : i32, i32, i32
  }
  func.func @transform_4(%arg0: i32) -> (i32, i32, i32) {
    %c0_i32 = arith.constant 0 : i32
    %c0_i32_0 = arith.constant 0 : i32
    %c0_i32_1 = arith.constant 0 : i32
    %c0_i32_2 = arith.constant 0 : i32
    return %c0_i32, %c0_i32_0, %c0_i32_1 : i32, i32, i32
  }
  func.func @transform_5(%arg0: i32) -> (i32, i32) {
    %c0_i32 = arith.constant 0 : i32
    %c0_i32_0 = arith.constant 0 : i32
    %c0_i32_1 = arith.constant 0 : i32
    return %c0_i32, %c0_i32_0 : i32, i32
  }
  func.func @transform_6(%arg0: i32) -> (i32, i32) {
    %c0_i32 = arith.constant 0 : i32
    %c0_i32_0 = arith.constant 0 : i32
    %c0_i32_1 = arith.constant 0 : i32
    return %c0_i32, %c0_i32_0 : i32, i32
  }
  func.func @transform_7(%arg0: i32) -> (i32, i32) {
    %c0_i32 = arith.constant 0 : i32
    %c0_i32_0 = arith.constant 0 : i32
    return %arg0, %c0_i32 : i32, i32
  }
}

</mosaic_0001>

<llo_original>
// kernel: prometheus_forward.1
$region0: #{prometheus_forward.1}
  #allocation0 [shape = 'u32[]', space=smem, size = 0x4, offset = 0x4, fixed_abs, tag = 'smem constant byte address 0x4 - core index']
  #allocation1 [shape = 'u32[144,128]{1,0:T(1,128)}', space=vmem, size = 0x12000, scoped, tag = 'internal scratch']
  #allocation2 [shape = 'f32[1,1]{1,0:T(1,128)S(1)}', space=vmem, size = 0x200, scoped, tag = 'scoped memory for prometheus_forward.1']
  %s0 = inlined_call_operand.vmem [shape: f32[256,8], index: 0, kind: input, shape index: {}]
  %s1 = inlined_call_operand.vmem [shape: f32[8,128], index: 1, kind: input, shape index: {}]
  %s2 = inlined_call_operand.vmem [shape: f32[1,128], index: 2, kind: input, shape index: {}]
  %s3 = inlined_call_operand.vmem [shape: f32[4,128,128], index: 3, kind: input, shape index: {}]
  %s4 = inlined_call_operand.vmem [shape: f32[4,1,128], index: 4, kind: input, shape index: {}]
  %s5 = inlined_call_operand.vmem [shape: f32[8,128], index: 5, kind: input, shape index: {}]
  %s6 = inlined_call_operand.<no memory space> [shape: f32[1,1], index: 6, kind: input, shape index: {}]
  %s7 = inlined_call_operand.vmem [shape: f32[16,128], index: 7, kind: output, shape index: {}]
  %s8 = sld [smem:[#allocation0]]
  $region61: #{prometheus_forward.1} parent=0
    _
  %s10 = ssub.s32 1, %s8
  %s11 = scalar_select 0, %s10, %s8
  %v12 = vstv %s6
  %13 = vst [vmem:[#allocation2] sm:$0x1] %v12
  loop: start=0, step=1, limit=4
  $region2: #{prometheus_forward.1} parent=0 // loop_pre_header
    _
  $region3: #{prometheus_forward.1} parent=0 // loop_header
    %s15 = sphi 0, %s19
    %p16 = scmp.ge.s32.totalorder %s15, 4
    %s25 = sphi 0, %s27
    %s28 = sphi 0, %s25
    %s29 = sphi 0, %s28
    %s45 = sphi 0, %s29
    %s49 = sphi 0, %s49
    %s51 = sphi 0, %s49
    %s52 = sphi 0, %s51
    %s66 = sphi 0, %s52
    %s70 = sphi 0, %s70
    %s72 = sphi 0, %s70
    %s73 = sphi 0, %s72
    %s87 = sphi 0, %s73
    %s91 = sphi 0, %s91
    %s93 = sphi 0, %s91
    %s94 = sphi 0, %s93
    %s108 = sphi 0, %s94
    %s112 = sphi 0, %s112
    %s114 = sphi 0, %s112
    %s115 = sphi 0, %s114
    %s129 = sphi 0, %s115
    %s133 = sphi 0, %s133
    %s135 = sphi 0, %s133
    %s136 = sphi 0, %s135
    %s150 = sphi 0, %s136
    %s154 = sphi 0, %s154
    %s156 = sphi 0, %s154
    %s157 = sphi 0, %s156
    %s171 = sphi 0, %s157
    %s177 = sphi 0, %s179
    %s180 = sphi 0, %s177
    %s181 = sphi 0, %s180
    %s197 = sphi 0, %s181
  $region4: #{prometheus_forward.1} parent=0 // loop_header_branch
    %18 = sbr.rel (%p16) target = $region8
  $region5: #{prometheus_forward.1} parent=0 // loop_body
    %s20 = ssub.s32 %s15, 1
    %s21 = ssub.s32 %s15, 2
    %s22 = sadd.s32 %s15, 1
    %s23 = ssub.s32 %s15, %s22
    %p24 = scmp.eq.s32.totalorder %s23, 0
    %s26 = sadd.s32 %s25, 1
    %s27 = scalar_select %p24, %s25, %s26
    %p30 = pneg %p24
    %p31 = scmp.eq.s32.totalorder %s15, 1
    %p32 = por %p30, %p31
    %p33 = scmp.ne.s32.totalorder %s25, %s28
    %p34 = scmp.eq.s32.totalorder %s15, 0
    %p35 = por %p33, %p34
    %p36 = scmp.ne.s32.totalorder %s25, %s28
    %p37 = scmp.eq.s32.totalorder %s20, 1
    %p38 = por %p36, %p37
    %p39 = scmp.ne.s32.totalorder %s28, %s29
    %p40 = scmp.eq.s32.totalorder %s20, 0
    %p41 = por %p39, %p40
    %p42 = scmp.ne.s32.totalorder %s28, %s29
    %p43 = scmp.eq.s32.totalorder %s21, 1
    %p44 = por %p42, %p43
    %p46 = scmp.ne.s32.totalorder %s29, %s45
    %p47 = scmp.eq.s32.totalorder %s21, 0
    %p48 = por %p46, %p47
    %s50 = sadd.s32 %s49, 1
    %p53 = scmp.eq.s32.totalorder %s15, 1
    %p54 = scmp.ne.s32.totalorder %s49, %s51
    %p55 = scmp.eq.s32.totalorder %s15, 0
    %p56 = por %p54, %p55
    %p57 = scmp.ne.s32.totalorder %s49, %s51
    %p58 = scmp.eq.s32.totalorder %s20, 1
    %p59 = por %p57, %p58
    %p60 = scmp.ne.s32.totalorder %s51, %s52
    %p61 = scmp.eq.s32.totalorder %s20, 0
    %p62 = por %p60, %p61
    %p63 = scmp.ne.s32.totalorder %s51, %s52
    %p64 = scmp.eq.s32.totalorder %s21, 1
    %p65 = por %p63, %p64
    %p67 = scmp.ne.s32.totalorder %s52, %s66
    %p68 = scmp.eq.s32.totalorder %s21, 0
    %p69 = por %p67, %p68
    %s71 = sadd.s32 %s70, 1
    %p74 = scmp.eq.s32.totalorder %s15, 1
    %p75 = scmp.ne.s32.totalorder %s70, %s72
    %p76 = scmp.eq.s32.totalorder %s15, 0
    %p77 = por %p75, %p76
    %p78 = scmp.ne.s32.totalorder %s70, %s72
    %p79 = scmp.eq.s32.totalorder %s20, 1
    %p80 = por %p78, %p79
    %p81 = scmp.ne.s32.totalorder %s72, %s73
    %p82 = scmp.eq.s32.totalorder %s20, 0
    %p83 = por %p81, %p82
    %p84 = scmp.ne.s32.totalorder %s72, %s73
    %p85 = scmp.eq.s32.totalorder %s21, 1
    %p86 = por %p84, %p85
    %p88 = scmp.ne.s32.totalorder %s73, %s87
    %p89 = scmp.eq.s32.totalorder %s21, 0
    %p90 = por %p88, %p89
    %s92 = sadd.s32 %s91, 1
    %p95 = scmp.eq.s32.totalorder %s15, 1
    %p96 = scmp.ne.s32.totalorder %s91, %s93
    %p97 = scmp.eq.s32.totalorder %s15, 0
    %p98 = por %p96, %p97
    %p99 = scmp.ne.s32.totalorder %s91, %s93
    %p100 = scmp.eq.s32.totalorder %s20, 1
    %p101 = por %p99, %p100
    %p102 = scmp.ne.s32.totalorder %s93, %s94
    %p103 = scmp.eq.s32.totalorder %s20, 0
    %p104 = por %p102, %p103
    %p105 = scmp.ne.s32.totalorder %s93, %s94
    %p106 = scmp.eq.s32.totalorder %s21, 1
    %p107 = por %p105, %p106
    %p109 = scmp.ne.s32.totalorder %s94, %s108
    %p110 = scmp.eq.s32.totalorder %s21, 0
    %p111 = por %p109, %p110
    %s113 = sadd.s32 %s112, 1
    %p116 = scmp.eq.s32.totalorder %s15, 1
    %p117 = scmp.ne.s32.totalorder %s112, %s114
    %p118 = scmp.eq.s32.totalorder %s15, 0
    %p119 = por %p117, %p118
    %p120 = scmp.ne.s32.totalorder %s112, %s114
    %p121 = scmp.eq.s32.totalorder %s20, 1
    %p122 = por %p120, %p121
    %p123 = scmp.ne.s32.totalorder %s114, %s115
    %p124 = scmp.eq.s32.totalorder %s20, 0
    %p125 = por %p123, %p124
    %p126 = scmp.ne.s32.totalorder %s114, %s115
    %p127 = scmp.eq.s32.totalorder %s21, 1
    %p128 = por %p126, %p127
    %p130 = scmp.ne.s32.totalorder %s115, %s129
    %p131 = scmp.eq.s32.totalorder %s21, 0
    %p132 = por %p130, %p131
    %s134 = sadd.s32 %s133, 1
    %p137 = scmp.eq.s32.totalorder %s15, 1
    %p138 = scmp.ne.s32.totalorder %s133, %s135
    %p139 = scmp.eq.s32.totalorder %s15, 0
    %p140 = por %p138, %p139
    %p141 = scmp.ne.s32.totalorder %s133, %s135
    %p142 = scmp.eq.s32.totalorder %s20, 1
    %p143 = por %p141, %p142
    %p144 = scmp.ne.s32.totalorder %s135, %s136
    %p145 = scmp.eq.s32.totalorder %s20, 0
    %p146 = por %p144, %p145
    %p147 = scmp.ne.s32.totalorder %s135, %s136
    %p148 = scmp.eq.s32.totalorder %s21, 1
    %p149 = por %p147, %p148
    %p151 = scmp.ne.s32.totalorder %s136, %s150
    %p152 = scmp.eq.s32.totalorder %s21, 0
    %p153 = por %p151, %p152
    %s155 = sadd.s32 %s154, 1
    %p158 = scmp.eq.s32.totalorder %s15, 1
    %p159 = scmp.ne.s32.totalorder %s154, %s156
    %p160 = scmp.eq.s32.totalorder %s15, 0
    %p161 = por %p159, %p160
    %p162 = scmp.ne.s32.totalorder %s154, %s156
    %p163 = scmp.eq.s32.totalorder %s20, 1
    %p164 = por %p162, %p163
    %p165 = scmp.ne.s32.totalorder %s156, %s157
    %p166 = scmp.eq.s32.totalorder %s20, 0
    %p167 = por %p165, %p166
    %p168 = scmp.ne.s32.totalorder %s156, %s157
    %p169 = scmp.eq.s32.totalorder %s21, 1
    %p170 = por %p168, %p169
    %p172 = scmp.ne.s32.totalorder %s157, %s171
    %p173 = scmp.eq.s32.totalorder %s21, 0
    %p174 = por %p172, %p173
    %s175 = ssub.s32 %s15, %s22
    %p176 = scmp.eq.s32.totalorder %s175, 0
    %s178 = sadd.s32 %s177, 1
    %s179 = scalar_select %p176, %s177, %s178
    %p182 = pneg %p176
    %p183 = scmp.eq.s32.totalorder %s15, 1
    %p184 = por %p182, %p183
    %p185 = scmp.ne.s32.totalorder %s177, %s180
    %p186 = scmp.eq.s32.totalorder %s15, 0
    %p187 = por %p185, %p186
    %p188 = scmp.ne.s32.totalorder %s177, %s180
    %p189 = scmp.eq.s32.totalorder %s20, 1
    %p190 = por %p188, %p189
    %p191 = scmp.ne.s32.totalorder %s180, %s181
    %p192 = scmp.eq.s32.totalorder %s20, 0
    %p193 = por %p191, %p192
    %p194 = scmp.ne.s32.totalorder %s180, %s181
    %p195 = scmp.eq.s32.totalorder %s21, 1
    %p196 = por %p194, %p195
    %p198 = scmp.ne.s32.totalorder %s181, %s197
    %p199 = scmp.eq.s32.totalorder %s21, 0
    %p200 = por %p198, %p199
    %p201 = scmp.le.s32.totalorder 1, %s15
    %p202 = scmp.lt.s32.totalorder %s15, 3
    %p203 = pnand %p201, %p202
    %p204 = pneg %p203
    // Predicated region
    $region9: #{prometheus_forward.1} parent=5 // pred_check
      _
    $region10: #{prometheus_forward.1} parent=5 // pred_check_branch
      %206 = sbr.rel (%p203) target = $region12
    $region11: #{prometheus_forward.1} parent=5 // pred_region
      %s207 = ssub.s32 %s15, 1
      // Predicated region
      $region13: #{prometheus_forward.1} parent=11 // pred_check
        %p208 = pneg %p62
      $region14: #{prometheus_forward.1} parent=11 // pred_check_branch
        %210 = sbr.rel (%p208) target = $region16
      $region15: #{prometheus_forward.1} parent=11 // pred_region
        _
      $region16: #{prometheus_forward.1} parent=11 // pred_fallthru
        _
      // Predicated region
      $region17: #{prometheus_forward.1} parent=11 // pred_check
        %p211 = pneg %p83
      $region18: #{prometheus_forward.1} parent=11 // pred_check_branch
        %213 = sbr.rel (%p211) target = $region20
      $region19: #{prometheus_forward.1} parent=11 // pred_region
        _
      $region20: #{prometheus_forward.1} parent=11 // pred_fallthru
        _
      // Predicated region
      $region21: #{prometheus_forward.1} parent=11 // pred_check
        %p214 = pneg %p104
      $region22: #{prometheus_forward.1} parent=11 // pred_check_branch
        %216 = sbr.rel (%p214) target = $region24
      $region23: #{prometheus_forward.1} parent=11 // pred_region
        _
      $region24: #{prometheus_forward.1} parent=11 // pred_fallthru
        _
      // Predicated region
      $region25: #{prometheus_forward.1} parent=11 // pred_check
        %p217 = pneg %p125
      $region26: #{prometheus_forward.1} parent=11 // pred_check_branch
        %219 = sbr.rel (%p217) target = $region28
      $region27: #{prometheus_forward.1} parent=11 // pred_region
        _
      $region28: #{prometheus_forward.1} parent=11 // pred_fallthru
        _
      // Predicated region
      $region29: #{prometheus_forward.1} parent=11 // pred_check
        %p220 = pneg %p146
      $region30: #{prometheus_forward.1} parent=11 // pred_check_branch
        %222 = sbr.rel (%p220) target = $region32
      $region31: #{prometheus_forward.1} parent=11 // pred_region
        _
      $region32: #{prometheus_forward.1} parent=11 // pred_fallthru
        _
      // Predicated region
      $region33: #{prometheus_forward.1} parent=11 // pred_check
        %p223 = pneg %p167
      $region34: #{prometheus_forward.1} parent=11 // pred_check_branch
        %225 = sbr.rel (%p223) target = $region36
      $region35: #{prometheus_forward.1} parent=11 // pred_region
        _
      $region36: #{prometheus_forward.1} parent=11 // pred_fallthru
        _
    $region12: #{prometheus_forward.1} parent=5 // pred_fallthru
      _
    %p226 = scmp.lt.s32.totalorder %s15, 2
    // Predicated region
    $region37: #{prometheus_forward.1} parent=5 // pred_check
      %p227 = pneg %p226
    $region38: #{prometheus_forward.1} parent=5 // pred_check_branch
      %229 = sbr.rel (%p227) target = $region40
    $region39: #{prometheus_forward.1} parent=5 // pred_region
      // Predicated region
      $region41: #{prometheus_forward.1} parent=39 // pred_check
        %p230 = pneg %p35
      $region42: #{prometheus_forward.1} parent=39 // pred_check_branch
        %232 = sbr.rel (%p230) target = $region44
      $region43: #{prometheus_forward.1} parent=39 // pred_region
        %s233 = smul.u32 16, %s15
        %p234 = scmp.lt.s32.totalorder %s233, 31
        %s235 = scalar_select %p234, %s233, 31
        %s236 = smul.addr %s235, 8
        %s237 = scalar_lea.vmem %s0, %s236
        %s238 = smul.u32 16, %s15
      $region44: #{prometheus_forward.1} parent=39 // pred_fallthru
        _
    $region40: #{prometheus_forward.1} parent=5 // pred_fallthru
      _
    %p239 = scmp.le.s32.totalorder 1, %s15
    %p240 = scmp.lt.s32.totalorder %s15, 3
    %p241 = pnand %p239, %p240
    %p242 = pneg %p241
    // Predicated region
    $region45: #{prometheus_forward.1} parent=5 // pred_check
      _
    $region46: #{prometheus_forward.1} parent=5 // pred_check_branch
      %244 = sbr.rel (%p241) target = $region48
    $region47: #{prometheus_forward.1} parent=5 // pred_region
      %s245 = ssub.s32 %s15, 1
      %s246 = smul.u32 16, %s20
      %p247 = scmp.lt.s32.totalorder %s246, 31
      %s248 = scalar_select %p247, %s246, 31
      %s249 = smul.addr %s248, 8
      %s250 = scalar_lea.vmem %s0, %s249
      %p251 = pneg %p41
      %p252 = pneg %p38
      %p253 = pneg %p62
      %p254 = pneg %p59
      %p255 = pneg %p83
      %p256 = pneg %p80
      %p257 = pneg %p104
      %p258 = pneg %p101
      %p259 = pneg %p125
      %p260 = pneg %p122
      %p261 = pneg %p146
      %p262 = pneg %p143
      %p263 = pneg %p167
      %p264 = pneg %p164
      %p265 = pneg %p193
      %p266 = pneg %p190
      %p267 = scmp.lt.s32.totalorder %s20, 1
      %s268 = scalar_select %p267, %s20, 1
      %s269 = smul.addr %s268, 8
      %s270 = scalar_lea.vmem %s7, %s269
      %s271 = smul.u32 16, %s20
      %p272 = scmp.lt.s32.totalorder %s271, 31
      %s273 = scalar_select %p272, %s271, 31
      %s274 = smul.addr %s273, 8
      %s275 = scalar_lea.vmem %s0, %s274
      %s276 = smul.u32 16, %s20
      %p277 = scmp.lt.s32.totalorder %s20, 1
      %s278 = scalar_select %p277, %s20, 1
      %s279 = smul.addr %s278, 8
      %s280 = scalar_lea.vmem %s7, %s279
      %v281 = vld [vmem:[%s275] sm:$0xff]
      %v282 = vld [vmem:[%s275 + $0x8] sm:$0xff]
      %v283 = vld [vmem:[%s275 + $0x10] sm:$0xff]
      %v284 = vld [vmem:[%s275 + $0x18] sm:$0xff]
      %v285 = vld [vmem:[%s275 + $0x20] sm:$0xff]
      %v286 = vld [vmem:[%s275 + $0x28] sm:$0xff]
      %v287 = vld [vmem:[%s275 + $0x30] sm:$0xff]
      %v288 = vld [vmem:[%s275 + $0x38] sm:$0xff]
      %v289 = vld [vmem:[%s275 + $0x40] sm:$0xff]
      %v290 = vld [vmem:[%s275 + $0x48] sm:$0xff]
      %v291 = vld [vmem:[%s275 + $0x50] sm:$0xff]
      %v292 = vld [vmem:[%s275 + $0x58] sm:$0xff]
      %v293 = vld [vmem:[%s275 + $0x60] sm:$0xff]
      %v294 = vld [vmem:[%s275 + $0x68] sm:$0xff]
      %v295 = vld [vmem:[%s275 + $0x70] sm:$0xff]
      %v296 = vld [vmem:[%s275 + $0x78] sm:$0xff]
      %v297 = vld [vmem:[%s1] sm:$0xff]
      %v298 = vld [vmem:[%s2] sm:$0x1]
      %v300 = vlaneseq
      %v301 = vshrl.u32 %v300, 7
      %v302 = vsub.s32 0, %v301
      %v303 = vrot.slane %v298, %v302
      %vm305 = vcmask 64512
      %v307 = vsel %vm305, %v281, 0
      %v310 = vsel %vm305, %v282, 0
      %v313 = vsel %vm305, %v283, 0
      %v316 = vsel %vm305, %v284, 0
      %v319 = vsel %vm305, %v285, 0
      %v322 = vsel %vm305, %v286, 0
      %v325 = vsel %vm305, %v287, 0
      %v328 = vsel %vm305, %v288, 0
      %v331 = vsel %vm305, %v289, 0
      %v334 = vsel %vm305, %v290, 0
      %v337 = vsel %vm305, %v291, 0
      %v340 = vsel %vm305, %v292, 0
      %v343 = vsel %vm305, %v293, 0
      %v346 = vsel %vm305, %v294, 0
      %v349 = vsel %vm305, %v295, 0
      %v352 = vsel %vm305, %v296, 0
      %354 = vmatprep.subr.mxu0 0.0
      %355 = vmatpush1.msra.mxu0 0.0
      %356 = vmatprep.subr.mxu0 0.0
      %357 = vmatpush1.msra.mxu0 0.0
      %358 = vmatprep.subr.mxu0 0.0
      %359 = vmatpush1.msra.mxu0 0.0
      %360 = vmatprep.subr.mxu0 0.0
      %361 = vmatpush1.msra.mxu0 0.0
      %362 = vmatprep.subr.mxu0 0.0
      %363 = vmatpush1.msra.mxu0 0.0
      %364 = vmatprep.subr.mxu0 0.0
      %365 = vmatpush1.msra.mxu0 0.0
      %366 = vmatprep.subr.mxu0 0.0
      %367 = vmatpush1.msra.mxu0 0.0
      %368 = vmatprep.subr.mxu0 0.0
      %369 = vmatpush1.msra.mxu0 0.0
      %370 = vmatprep.subr.mxu0 0.0
      %371 = vmatpush1.msra.mxu0 0.0
      %372 = vmatprep.subr.mxu0 0.0
      %373 = vmatpush1.msra.mxu0 0.0
      %374 = vmatprep.subr.mxu0 0.0
      %375 = vmatpush1.msra.mxu0 0.0
      %376 = vmatprep.subr.mxu0 0.0
      %377 = vmatpush1.msra.mxu0 0.0
      %378 = vmatprep.subr.mxu0 0.0
      %379 = vmatpush1.msra.mxu0 0.0
      %380 = vmatprep.subr.mxu0 0.0
      %381 = vmatpush1.msra.mxu0 0.0
      %382 = vmatprep.subr.mxu0 0.0
      %383 = vmatpush1.msra.mxu0 0.0
      %384 = vmatprep.subr.mxu0 0.0
      %385 = vmatpush1.msra.mxu0 %v297
      %386 = vmatprep.subr.mxu0 0.0
      %387 = vmatpush2.msra.mxu0 0.0
      %388 = vmatprep.subr.mxu0 0.0
      %389 = vmatpush2.msra.mxu0 0.0
      %390 = vmatprep.subr.mxu0 0.0
      %391 = vmatpush2.msra.mxu0 0.0
      %392 = vmatprep.subr.mxu0 0.0
      %393 = vmatpush2.msra.mxu0 0.0
      %394 = vmatprep.subr.mxu0 0.0
      %395 = vmatpush2.msra.mxu0 0.0
      %396 = vmatprep.subr.mxu0 0.0
      %397 = vmatpush2.msra.mxu0 0.0
      %398 = vmatprep.subr.mxu0 0.0
      %399 = vmatpush2.msra.mxu0 0.0
      %400 = vmatprep.subr.mxu0 0.0
      %401 = vmatpush2.msra.mxu0 0.0
      %402 = vmatprep.subr.mxu0 0.0
      %403 = vmatpush2.msra.mxu0 0.0
      %404 = vmatprep.subr.mxu0 0.0
      %405 = vmatpush2.msra.mxu0 0.0
      %406 = vmatprep.subr.mxu0 0.0
      %407 = vmatpush2.msra.mxu0 0.0
      %408 = vmatprep.subr.mxu0 0.0
      %409 = vmatpush2.msra.mxu0 0.0
      %410 = vmatprep.subr.mxu0 0.0
      %411 = vmatpush2.msra.mxu0 0.0
      %412 = vmatprep.subr.mxu0 0.0
      %413 = vmatpush2.msra.mxu0 0.0
      %414 = vmatprep.subr.mxu0 0.0
      %415 = vmatpush2.msra.mxu0 0.0
      %416 = vmatprep.subr.mxu0 0.0
      %417 = vmatpush2.msra.mxu0 0.0
      %418 = vmatprep.mubr.f32.mxu0 0.0
      %419 = vmatmul.mubr.f32.gmra.mxu0 %v307
      %v420 = vpop.f32.mrf.mxu0
      %v421 = vadd.f32 %v303, %v420
      %v422 = vpop.f32.mrf.mxu0
      %423 = vmatprep.mubr.f32.mxu0 0.0
      %424 = vmatmul.mubr.f32.gmra.mxu0 %v310
      %v425 = vpop.f32.mrf.mxu0
      %v426 = vadd.f32 %v303, %v425
      %v427 = vpop.f32.mrf.mxu0
      %428 = vmatprep.mubr.f32.mxu0 0.0
      %429 = vmatmul.mubr.f32.gmra.mxu0 %v313
      %v430 = vpop.f32.mrf.mxu0
      %v431 = vadd.f32 %v303, %v430
      %v432 = vpop.f32.mrf.mxu0
      %433 = vmatprep.mubr.f32.mxu0 0.0
      %434 = vmatmul.mubr.f32.gmra.mxu0 %v316
      %v435 = vpop.f32.mrf.mxu0
      %v436 = vadd.f32 %v303, %v435
      %v437 = vpop.f32.mrf.mxu0
      %438 = vmatprep.mubr.f32.mxu0 0.0
      %439 = vmatmul.mubr.f32.gmra.mxu0 %v319
      %v440 = vpop.f32.mrf.mxu0
      %v441 = vadd.f32 %v303, %v440
      %v442 = vpop.f32.mrf.mxu0
      %443 = vmatprep.mubr.f32.mxu0 0.0
      %444 = vmatmul.mubr.f32.gmra.mxu0 %v322
      %v445 = vpop.f32.mrf.mxu0
      %v446 = vadd.f32 %v303, %v445
      %v447 = vpop.f32.mrf.mxu0
      %448 = vmatprep.mubr.f32.mxu0 0.0
      %449 = vmatmul.mubr.f32.gmra.mxu0 %v325
      %v450 = vpop.f32.mrf.mxu0
      %v451 = vadd.f32 %v303, %v450
      %v452 = vpop.f32.mrf.mxu0
      %453 = vmatprep.mubr.f32.mxu0 0.0
      %454 = vmatmul.mubr.f32.gmra.mxu0 %v328
      %v455 = vpop.f32.mrf.mxu0
      %v456 = vadd.f32 %v303, %v455
      %v457 = vpop.f32.mrf.mxu0
      %458 = vmatprep.mubr.f32.mxu0 0.0
      %459 = vmatmul.mubr.f32.gmra.mxu0 %v331
      %v460 = vpop.f32.mrf.mxu0
      %v461 = vadd.f32 %v303, %v460
      %v462 = vpop.f32.mrf.mxu0
      %463 = vmatprep.mubr.f32.mxu0 0.0
      %464 = vmatmul.mubr.f32.gmra.mxu0 %v334
      %v465 = vpop.f32.mrf.mxu0
      %v466 = vadd.f32 %v303, %v465
      %v467 = vpop.f32.mrf.mxu0
      %468 = vmatprep.mubr.f32.mxu0 0.0
      %469 = vmatmul.mubr.f32.gmra.mxu0 %v337
      %v470 = vpop.f32.mrf.mxu0
      %v471 = vadd.f32 %v303, %v470
      %v472 = vpop.f32.mrf.mxu0
      %473 = vmatprep.mubr.f32.mxu0 0.0
      %474 = vmatmul.mubr.f32.gmra.mxu0 %v340
      %v475 = vpop.f32.mrf.mxu0
      %v476 = vadd.f32 %v303, %v475
      %v477 = vpop.f32.mrf.mxu0
      %478 = vmatprep.mubr.f32.mxu0 0.0
      %479 = vmatmul.mubr.f32.gmra.mxu0 %v343
      %v480 = vpop.f32.mrf.mxu0
      %v481 = vadd.f32 %v303, %v480
      %v482 = vpop.f32.mrf.mxu0
      %483 = vmatprep.mubr.f32.mxu0 0.0
      %484 = vmatmul.mubr.f32.gmra.mxu0 %v346
      %v485 = vpop.f32.mrf.mxu0
      %v486 = vadd.f32 %v303, %v485
      %v487 = vpop.f32.mrf.mxu0
      %488 = vmatprep.mubr.f32.mxu0 0.0
      %489 = vmatmul.mubr.f32.gmra.mxu0 %v349
      %v490 = vpop.f32.mrf.mxu0
      %v491 = vadd.f32 %v303, %v490
      %v492 = vpop.f32.mrf.mxu0
      %493 = vmatprep.mubr.f32.mxu0 0.0
      %494 = vmatmul.mubr.f32.gmra.mxu0 %v352
      %v495 = vpop.f32.mrf.mxu0
      %v496 = vadd.f32 %v303, %v495
      %v497 = vpop.f32.mrf.mxu0
      %498 = vdwg.mxu0
      %v499 = vmul.f32 %v421, 0.1
      %v500 = vmul.f32 %v426, 0.1
      %v501 = vmul.f32 %v431, 0.1
      %v502 = vmul.f32 %v436, 0.1
      %v503 = vmul.f32 %v441, 0.1
      %v504 = vmul.f32 %v446, 0.1
      %v505 = vmul.f32 %v451, 0.1
      %v506 = vmul.f32 %v456, 0.1
      %v507 = vmul.f32 %v461, 0.1
      %v508 = vmul.f32 %v466, 0.1
      %v509 = vmul.f32 %v471, 0.1
      %v510 = vmul.f32 %v476, 0.1
      %v511 = vmul.f32 %v481, 0.1
      %v512 = vmul.f32 %v486, 0.1
      %v513 = vmul.f32 %v491, 0.1
      %v514 = vmul.f32 %v496, 0.1
      %v515 = vmax.f32 %v421, %v499
      %v516 = vmax.f32 %v426, %v500
      %v517 = vmax.f32 %v431, %v501
      %v518 = vmax.f32 %v436, %v502
      %v519 = vmax.f32 %v441, %v503
      %v520 = vmax.f32 %v446, %v504
      %v521 = vmax.f32 %v451, %v505
      %v522 = vmax.f32 %v456, %v506
      %v523 = vmax.f32 %v461, %v507
      %v524 = vmax.f32 %v466, %v508
      %v525 = vmax.f32 %v471, %v509
      %v526 = vmax.f32 %v476, %v510
      %v527 = vmax.f32 %v481, %v511
      %v528 = vmax.f32 %v486, %v512
      %v529 = vmax.f32 %v491, %v513
      %v530 = vmax.f32 %v496, %v514
      %v531 = vld [vmem:[%s3] sm:$0xff]
      %v532 = vld [vmem:[%s3 + $0x8] sm:$0xff]
      %v533 = vld [vmem:[%s3 + $0x10] sm:$0xff]
      %v534 = vld [vmem:[%s3 + $0x18] sm:$0xff]
      %v535 = vld [vmem:[%s3 + $0x20] sm:$0xff]
      %v536 = vld [vmem:[%s3 + $0x28] sm:$0xff]
      %v537 = vld [vmem:[%s3 + $0x30] sm:$0xff]
      %v538 = vld [vmem:[%s3 + $0x38] sm:$0xff]
      %v539 = vld [vmem:[%s3 + $0x40] sm:$0xff]
      %v540 = vld [vmem:[%s3 + $0x48] sm:$0xff]
      %v541 = vld [vmem:[%s3 + $0x50] sm:$0xff]
      %v542 = vld [vmem:[%s3 + $0x58] sm:$0xff]
      %v543 = vld [vmem:[%s3 + $0x60] sm:$0xff]
      %v544 = vld [vmem:[%s3 + $0x68] sm:$0xff]
      %v545 = vld [vmem:[%s3 + $0x70] sm:$0xff]
      %v546 = vld [vmem:[%s3 + $0x78] sm:$0xff]
      %v547 = vld [vmem:[%s4] sm:$0x1]
      %v549 = vlaneseq
      %v550 = vshrl.u32 %v549, 7
      %v551 = vsub.s32 0, %v550
      %v552 = vrot.slane %v547, %v551
      %554 = vmatprep.subr.mxu0 0.0
      %555 = vmatpush1.msra.mxu0 %v546
      %556 = vmatprep.subr.mxu0 0.0
      %557 = vmatpush1.msra.mxu0 %v545
      %558 = vmatprep.subr.mxu0 0.0
      %559 = vmatpush1.msra.mxu0 %v544
      %560 = vmatprep.subr.mxu0 0.0
      %561 = vmatpush1.msra.mxu0 %v543
      %562 = vmatprep.subr.mxu0 0.0
      %563 = vmatpush1.msra.mxu0 %v542
      %564 = vmatprep.subr.mxu0 0.0
      %565 = vmatpush1.msra.mxu0 %v541
      %566 = vmatprep.subr.mxu0 0.0
      %567 = vmatpush1.msra.mxu0 %v540
      %568 = vmatprep.subr.mxu0 0.0
      %569 = vmatpush1.msra.mxu0 %v539
      %570 = vmatprep.subr.mxu0 0.0
      %571 = vmatpush1.msra.mxu0 %v538
      %572 = vmatprep.subr.mxu0 0.0
      %573 = vmatpush1.msra.mxu0 %v537
      %574 = vmatprep.subr.mxu0 0.0
      %575 = vmatpush1.msra.mxu0 %v536
      %576 = vmatprep.subr.mxu0 0.0
      %577 = vmatpush1.msra.mxu0 %v535
      %578 = vmatprep.subr.mxu0 0.0
      %579 = vmatpush1.msra.mxu0 %v534
      %580 = vmatprep.subr.mxu0 0.0
      %581 = vmatpush1.msra.mxu0 %v533
      %582 = vmatprep.subr.mxu0 0.0
      %583 = vmatpush1.msra.mxu0 %v532
      %584 = vmatprep.subr.mxu0 0.0
      %585 = vmatpush1.msra.mxu0 %v531
      %586 = vmatprep.subr.mxu0 0.0
      %587 = vmatpush2.msra.mxu0 0.0
      %588 = vmatprep.subr.mxu0 0.0
      %589 = vmatpush2.msra.mxu0 0.0
      %590 = vmatprep.subr.mxu0 0.0
      %591 = vmatpush2.msra.mxu0 0.0
      %592 = vmatprep.subr.mxu0 0.0
      %593 = vmatpush2.msra.mxu0 0.0
      %594 = vmatprep.subr.mxu0 0.0
      %595 = vmatpush2.msra.mxu0 0.0
      %596 = vmatprep.subr.mxu0 0.0
      %597 = vmatpush2.msra.mxu0 0.0
      %598 = vmatprep.subr.mxu0 0.0
      %599 = vmatpush2.msra.mxu0 0.0
      %600 = vmatprep.subr.mxu0 0.0
      %601 = vmatpush2.msra.mxu0 0.0
      %602 = vmatprep.subr.mxu0 0.0
      %603 = vmatpush2.msra.mxu0 0.0
      %604 = vmatprep.subr.mxu0 0.0
      %605 = vmatpush2.msra.mxu0 0.0
      %606 = vmatprep.subr.mxu0 0.0
      %607 = vmatpush2.msra.mxu0 0.0
      %608 = vmatprep.subr.mxu0 0.0
      %609 = vmatpush2.msra.mxu0 0.0
      %610 = vmatprep.subr.mxu0 0.0
      %611 = vmatpush2.msra.mxu0 0.0
      %612 = vmatprep.subr.mxu0 0.0
      %613 = vmatpush2.msra.mxu0 0.0
      %614 = vmatprep.subr.mxu0 0.0
      %615 = vmatpush2.msra.mxu0 0.0
      %616 = vmatprep.subr.mxu0 0.0
      %617 = vmatpush2.msra.mxu0 0.0
      %618 = vmatprep.mubr.f32.mxu0 0.0
      %619 = vmatmul.mubr.f32.gmra.mxu0 %v515
      %v620 = vpop.f32.mrf.mxu0
      %v621 = vadd.f32 %v552, %v620
      %v622 = vpop.f32.mrf.mxu0
      %623 = vmatprep.mubr.f32.mxu0 0.0
      %624 = vmatmul.mubr.f32.gmra.mxu0 %v516
      %v625 = vpop.f32.mrf.mxu0
      %v626 = vadd.f32 %v552, %v625
      %v627 = vpop.f32.mrf.mxu0
      %628 = vmatprep.mubr.f32.mxu0 0.0
      %629 = vmatmul.mubr.f32.gmra.mxu0 %v517
      %v630 = vpop.f32.mrf.mxu0
      %v631 = vadd.f32 %v552, %v630
      %v632 = vpop.f32.mrf.mxu0
      %633 = vmatprep.mubr.f32.mxu0 0.0
      %634 = vmatmul.mubr.f32.gmra.mxu0 %v518
      %v635 = vpop.f32.mrf.mxu0
      %v636 = vadd.f32 %v552, %v635
      %v637 = vpop.f32.mrf.mxu0
      %638 = vmatprep.mubr.f32.mxu0 0.0
      %639 = vmatmul.mubr.f32.gmra.mxu0 %v519
      %v640 = vpop.f32.mrf.mxu0
      %v641 = vadd.f32 %v552, %v640
      %v642 = vpop.f32.mrf.mxu0
      %643 = vmatprep.mubr.f32.mxu0 0.0
      %644 = vmatmul.mubr.f32.gmra.mxu0 %v520
      %v645 = vpop.f32.mrf.mxu0
      %v646 = vadd.f32 %v552, %v645
      %v647 = vpop.f32.mrf.mxu0
      %648 = vmatprep.mubr.f32.mxu0 0.0
      %649 = vmatmul.mubr.f32.gmra.mxu0 %v521
      %v650 = vpop.f32.mrf.mxu0
      %v651 = vadd.f32 %v552, %v650
      %v652 = vpop.f32.mrf.mxu0
      %653 = vmatprep.mubr.f32.mxu0 0.0
      %654 = vmatmul.mubr.f32.gmra.mxu0 %v522
      %v655 = vpop.f32.mrf.mxu0
      %v656 = vadd.f32 %v552, %v655
      %v657 = vpop.f32.mrf.mxu0
      %658 = vmatprep.mubr.f32.mxu0 0.0
      %659 = vmatmul.mubr.f32.gmra.mxu0 %v523
      %v660 = vpop.f32.mrf.mxu0
      %v661 = vadd.f32 %v552, %v660
      %v662 = vpop.f32.mrf.mxu0
      %663 = vmatprep.mubr.f32.mxu0 0.0
      %664 = vmatmul.mubr.f32.gmra.mxu0 %v524
      %v665 = vpop.f32.mrf.mxu0
      %v666 = vadd.f32 %v552, %v665
      %v667 = vpop.f32.mrf.mxu0
      %668 = vmatprep.mubr.f32.mxu0 0.0
      %669 = vmatmul.mubr.f32.gmra.mxu0 %v525
      %v670 = vpop.f32.mrf.mxu0
      %v671 = vadd.f32 %v552, %v670
      %v672 = vpop.f32.mrf.mxu0
      %673 = vmatprep.mubr.f32.mxu0 0.0
      %674 = vmatmul.mubr.f32.gmra.mxu0 %v526
      %v675 = vpop.f32.mrf.mxu0
      %v676 = vadd.f32 %v552, %v675
      %v677 = vpop.f32.mrf.mxu0
      %678 = vmatprep.mubr.f32.mxu0 0.0
      %679 = vmatmul.mubr.f32.gmra.mxu0 %v527
      %v680 = vpop.f32.mrf.mxu0
      %v681 = vadd.f32 %v552, %v680
      %v682 = vpop.f32.mrf.mxu0
      %683 = vmatprep.mubr.f32.mxu0 0.0
      %684 = vmatmul.mubr.f32.gmra.mxu0 %v528
      %v685 = vpop.f32.mrf.mxu0
      %v686 = vadd.f32 %v552, %v685
      %v687 = vpop.f32.mrf.mxu0
      %688 = vmatprep.mubr.f32.mxu0 0.0
      %689 = vmatmul.mubr.f32.gmra.mxu0 %v529
      %v690 = vpop.f32.mrf.mxu0
      %v691 = vadd.f32 %v552, %v690
      %v692 = vpop.f32.mrf.mxu0
      %693 = vmatprep.mubr.f32.mxu0 0.0
      %694 = vmatmul.mubr.f32.gmra.mxu0 %v530
      %v695 = vpop.f32.mrf.mxu0
      %v696 = vadd.f32 %v552, %v695
      %v697 = vpop.f32.mrf.mxu0
      %698 = vdwg.mxu0
      %v699 = vmul.f32 %v621, 0.1
      %v700 = vmul.f32 %v626, 0.1
      %v701 = vmul.f32 %v631, 0.1
      %v702 = vmul.f32 %v636, 0.1
      %v703 = vmul.f32 %v641, 0.1
      %v704 = vmul.f32 %v646, 0.1
      %v705 = vmul.f32 %v651, 0.1
      %v706 = vmul.f32 %v656, 0.1
      %v707 = vmul.f32 %v661, 0.1
      %v708 = vmul.f32 %v666, 0.1
      %v709 = vmul.f32 %v671, 0.1
      %v710 = vmul.f32 %v676, 0.1
      %v711 = vmul.f32 %v681, 0.1
      %v712 = vmul.f32 %v686, 0.1
      %v713 = vmul.f32 %v691, 0.1
      %v714 = vmul.f32 %v696, 0.1
      %v715 = vmax.f32 %v621, %v699
      %v716 = vmax.f32 %v626, %v700
      %v717 = vmax.f32 %v631, %v701
      %v718 = vmax.f32 %v636, %v702
      %v719 = vmax.f32 %v641, %v703
      %v720 = vmax.f32 %v646, %v704
      %v721 = vmax.f32 %v651, %v705
      %v722 = vmax.f32 %v656, %v706
      %v723 = vmax.f32 %v661, %v707
      %v724 = vmax.f32 %v666, %v708
      %v725 = vmax.f32 %v671, %v709
      %v726 = vmax.f32 %v676, %v710
      %v727 = vmax.f32 %v681, %v711
      %v728 = vmax.f32 %v686, %v712
      %v729 = vmax.f32 %v691, %v713
      %v730 = vmax.f32 %v696, %v714
      %v731 = vadd.f32 %v515, %v715
      %v732 = vadd.f32 %v516, %v716
      %v733 = vadd.f32 %v517, %v717
      %v734 = vadd.f32 %v518, %v718
      %v735 = vadd.f32 %v519, %v719
      %v736 = vadd.f32 %v520, %v720
      %v737 = vadd.f32 %v521, %v721
      %v738 = vadd.f32 %v522, %v722
      %v739 = vadd.f32 %v523, %v723
      %v740 = vadd.f32 %v524, %v724
      %v741 = vadd.f32 %v525, %v725
      %v742 = vadd.f32 %v526, %v726
      %v743 = vadd.f32 %v527, %v727
      %v744 = vadd.f32 %v528, %v728
      %v745 = vadd.f32 %v529, %v729
      %v746 = vadd.f32 %v530, %v730
      %s747 = scalar_lea.vmem %s3, 128
      %v748 = vld [vmem:[%s747] sm:$0xff]
      %v749 = vld [vmem:[%s747 + $0x8] sm:$0xff]
      %v750 = vld [vmem:[%s747 + $0x10] sm:$0xff]
      %v751 = vld [vmem:[%s747 + $0x18] sm:$0xff]
      %v752 = vld [vmem:[%s747 + $0x20] sm:$0xff]
      %v753 = vld [vmem:[%s747 + $0x28] sm:$0xff]
      %v754 = vld [vmem:[%s747 + $0x30] sm:$0xff]
      %v755 = vld [vmem:[%s747 + $0x38] sm:$0xff]
      %v756 = vld [vmem:[%s747 + $0x40] sm:$0xff]
      %v757 = vld [vmem:[%s747 + $0x48] sm:$0xff]
      %v758 = vld [vmem:[%s747 + $0x50] sm:$0xff]
      %v759 = vld [vmem:[%s747 + $0x58] sm:$0xff]
      %v760 = vld [vmem:[%s747 + $0x60] sm:$0xff]
      %v761 = vld [vmem:[%s747 + $0x68] sm:$0xff]
      %v762 = vld [vmem:[%s747 + $0x70] sm:$0xff]
      %v763 = vld [vmem:[%s747 + $0x78] sm:$0xff]
      %s764 = scalar_lea.vmem %s4, 1
      %v765 = vld [vmem:[%s764] sm:$0x1]
      %v767 = vlaneseq
      %v768 = vshrl.u32 %v767, 7
      %v769 = vsub.s32 0, %v768
      %v770 = vrot.slane %v765, %v769
      %772 = vmatprep.subr.mxu0 0.0
      %773 = vmatpush1.msra.mxu0 %v763
      %774 = vmatprep.subr.mxu0 0.0
      %775 = vmatpush1.msra.mxu0 %v762
      %776 = vmatprep.subr.mxu0 0.0
      %777 = vmatpush1.msra.mxu0 %v761
      %778 = vmatprep.subr.mxu0 0.0
      %779 = vmatpush1.msra.mxu0 %v760
      %780 = vmatprep.subr.mxu0 0.0
      %781 = vmatpush1.msra.mxu0 %v759
      %782 = vmatprep.subr.mxu0 0.0
      %783 = vmatpush1.msra.mxu0 %v758
      %784 = vmatprep.subr.mxu0 0.0
      %785 = vmatpush1.msra.mxu0 %v757
      %786 = vmatprep.subr.mxu0 0.0
      %787 = vmatpush1.msra.mxu0 %v756
      %788 = vmatprep.subr.mxu0 0.0
      %789 = vmatpush1.msra.mxu0 %v755
      %790 = vmatprep.subr.mxu0 0.0
      %791 = vmatpush1.msra.mxu0 %v754
      %792 = vmatprep.subr.mxu0 0.0
      %793 = vmatpush1.msra.mxu0 %v753
      %794 = vmatprep.subr.mxu0 0.0
      %795 = vmatpush1.msra.mxu0 %v752
      %796 = vmatprep.subr.mxu0 0.0
      %797 = vmatpush1.msra.mxu0 %v751
      %798 = vmatprep.subr.mxu0 0.0
      %799 = vmatpush1.msra.mxu0 %v750
      %800 = vmatprep.subr.mxu0 0.0
      %801 = vmatpush1.msra.mxu0 %v749
      %802 = vmatprep.subr.mxu0 0.0
      %803 = vmatpush1.msra.mxu0 %v748
      %804 = vmatprep.subr.mxu0 0.0
      %805 = vmatpush2.msra.mxu0 0.0
      %806 = vmatprep.subr.mxu0 0.0
      %807 = vmatpush2.msra.mxu0 0.0
      %808 = vmatprep.subr.mxu0 0.0
      %809 = vmatpush2.msra.mxu0 0.0
      %810 = vmatprep.subr.mxu0 0.0
      %811 = vmatpush2.msra.mxu0 0.0
      %812 = vmatprep.subr.mxu0 0.0
      %813 = vmatpush2.msra.mxu0 0.0
      %814 = vmatprep.subr.mxu0 0.0
      %815 = vmatpush2.msra.mxu0 0.0
      %816 = vmatprep.subr.mxu0 0.0
      %817 = vmatpush2.msra.mxu0 0.0
      %818 = vmatprep.subr.mxu0 0.0
      %819 = vmatpush2.msra.mxu0 0.0
      %820 = vmatprep.subr.mxu0 0.0
      %821 = vmatpush2.msra.mxu0 0.0
      %822 = vmatprep.subr.mxu0 0.0
      %823 = vmatpush2.msra.mxu0 0.0
      %824 = vmatprep.subr.mxu0 0.0
      %825 = vmatpush2.msra.mxu0 0.0
      %826 = vmatprep.subr.mxu0 0.0
      %827 = vmatpush2.msra.mxu0 0.0
      %828 = vmatprep.subr.mxu0 0.0
      %829 = vmatpush2.msra.mxu0 0.0
      %830 = vmatprep.subr.mxu0 0.0
      %831 = vmatpush2.msra.mxu0 0.0
      %832 = vmatprep.subr.mxu0 0.0
      %833 = vmatpush2.msra.mxu0 0.0
      %834 = vmatprep.subr.mxu0 0.0
      %835 = vmatpush2.msra.mxu0 0.0
      %836 = vmatprep.mubr.f32.mxu0 0.0
      %837 = vmatmul.mubr.f32.gmra.mxu0 %v731
      %v838 = vpop.f32.mrf.mxu0
      %v839 = vadd.f32 %v770, %v838
      %v840 = vpop.f32.mrf.mxu0
      %841 = vmatprep.mubr.f32.mxu0 0.0
      %842 = vmatmul.mubr.f32.gmra.mxu0 %v732
      %v843 = vpop.f32.mrf.mxu0
      %v844 = vadd.f32 %v770, %v843
      %v845 = vpop.f32.mrf.mxu0
      %846 = vmatprep.mubr.f32.mxu0 0.0
      %847 = vmatmul.mubr.f32.gmra.mxu0 %v733
      %v848 = vpop.f32.mrf.mxu0
      %v849 = vadd.f32 %v770, %v848
      %v850 = vpop.f32.mrf.mxu0
      %851 = vmatprep.mubr.f32.mxu0 0.0
      %852 = vmatmul.mubr.f32.gmra.mxu0 %v734
      %v853 = vpop.f32.mrf.mxu0
      %v854 = vadd.f32 %v770, %v853
      %v855 = vpop.f32.mrf.mxu0
      %856 = vmatprep.mubr.f32.mxu0 0.0
      %857 = vmatmul.mubr.f32.gmra.mxu0 %v735
      %v858 = vpop.f32.mrf.mxu0
      %v859 = vadd.f32 %v770, %v858
      %v860 = vpop.f32.mrf.mxu0
      %861 = vmatprep.mubr.f32.mxu0 0.0
      %862 = vmatmul.mubr.f32.gmra.mxu0 %v736
      %v863 = vpop.f32.mrf.mxu0
      %v864 = vadd.f32 %v770, %v863
      %v865 = vpop.f32.mrf.mxu0
      %866 = vmatprep.mubr.f32.mxu0 0.0
      %867 = vmatmul.mubr.f32.gmra.mxu0 %v737
      %v868 = vpop.f32.mrf.mxu0
      %v869 = vadd.f32 %v770, %v868
      %v870 = vpop.f32.mrf.mxu0
      %871 = vmatprep.mubr.f32.mxu0 0.0
      %872 = vmatmul.mubr.f32.gmra.mxu0 %v738
      %v873 = vpop.f32.mrf.mxu0
      %v874 = vadd.f32 %v770, %v873
      %v875 = vpop.f32.mrf.mxu0
      %876 = vmatprep.mubr.f32.mxu0 0.0
      %877 = vmatmul.mubr.f32.gmra.mxu0 %v739
      %v878 = vpop.f32.mrf.mxu0
      %v879 = vadd.f32 %v770, %v878
      %v880 = vpop.f32.mrf.mxu0
      %881 = vmatprep.mubr.f32.mxu0 0.0
      %882 = vmatmul.mubr.f32.gmra.mxu0 %v740
      %v883 = vpop.f32.mrf.mxu0
      %v884 = vadd.f32 %v770, %v883
      %v885 = vpop.f32.mrf.mxu0
      %886 = vmatprep.mubr.f32.mxu0 0.0
      %887 = vmatmul.mubr.f32.gmra.mxu0 %v741
      %v888 = vpop.f32.mrf.mxu0
      %v889 = vadd.f32 %v770, %v888
      %v890 = vpop.f32.mrf.mxu0
      %891 = vmatprep.mubr.f32.mxu0 0.0
      %892 = vmatmul.mubr.f32.gmra.mxu0 %v742
      %v893 = vpop.f32.mrf.mxu0
      %v894 = vadd.f32 %v770, %v893
      %v895 = vpop.f32.mrf.mxu0
      %896 = vmatprep.mubr.f32.mxu0 0.0
      %897 = vmatmul.mubr.f32.gmra.mxu0 %v743
      %v898 = vpop.f32.mrf.mxu0
      %v899 = vadd.f32 %v770, %v898
      %v900 = vpop.f32.mrf.mxu0
      %901 = vmatprep.mubr.f32.mxu0 0.0
      %902 = vmatmul.mubr.f32.gmra.mxu0 %v744
      %v903 = vpop.f32.mrf.mxu0
      %v904 = vadd.f32 %v770, %v903
      %v905 = vpop.f32.mrf.mxu0
      %906 = vmatprep.mubr.f32.mxu0 0.0
      %907 = vmatmul.mubr.f32.gmra.mxu0 %v745
      %v908 = vpop.f32.mrf.mxu0
      %v909 = vadd.f32 %v770, %v908
      %v910 = vpop.f32.mrf.mxu0
      %911 = vmatprep.mubr.f32.mxu0 0.0
      %912 = vmatmul.mubr.f32.gmra.mxu0 %v746
      %v913 = vpop.f32.mrf.mxu0
      %v914 = vadd.f32 %v770, %v913
      %v915 = vpop.f32.mrf.mxu0
      %916 = vdwg.mxu0
      %v917 = vmul.f32 %v839, 0.1
      %v918 = vmul.f32 %v844, 0.1
      %v919 = vmul.f32 %v849, 0.1
      %v920 = vmul.f32 %v854, 0.1
      %v921 = vmul.f32 %v859, 0.1
      %v922 = vmul.f32 %v864, 0.1
      %v923 = vmul.f32 %v869, 0.1
      %v924 = vmul.f32 %v874, 0.1
      %v925 = vmul.f32 %v879, 0.1
      %v926 = vmul.f32 %v884, 0.1
      %v927 = vmul.f32 %v889, 0.1
      %v928 = vmul.f32 %v894, 0.1
      %v929 = vmul.f32 %v899, 0.1
      %v930 = vmul.f32 %v904, 0.1
      %v931 = vmul.f32 %v909, 0.1
      %v932 = vmul.f32 %v914, 0.1
      %v933 = vmax.f32 %v839, %v917
      %v934 = vmax.f32 %v844, %v918
      %v935 = vmax.f32 %v849, %v919
      %v936 = vmax.f32 %v854, %v920
      %v937 = vmax.f32 %v859, %v921
      %v938 = vmax.f32 %v864, %v922
      %v939 = vmax.f32 %v869, %v923
      %v940 = vmax.f32 %v874, %v924
      %v941 = vmax.f32 %v879, %v925
      %v942 = vmax.f32 %v884, %v926
      %v943 = vmax.f32 %v889, %v927
      %v944 = vmax.f32 %v894, %v928
      %v945 = vmax.f32 %v899, %v929
      %v946 = vmax.f32 %v904, %v930
      %v947 = vmax.f32 %v909, %v931
      %v948 = vmax.f32 %v914, %v932
      %v949 = vadd.f32 %v731, %v933
      %v950 = vadd.f32 %v732, %v934
      %v951 = vadd.f32 %v733, %v935
      %v952 = vadd.f32 %v734, %v936
      %v953 = vadd.f32 %v735, %v937
      %v954 = vadd.f32 %v736, %v938
      %v955 = vadd.f32 %v737, %v939
      %v956 = vadd.f32 %v738, %v940
      %v957 = vadd.f32 %v739, %v941
      %v958 = vadd.f32 %v740, %v942
      %v959 = vadd.f32 %v741, %v943
      %v960 = vadd.f32 %v742, %v944
      %v961 = vadd.f32 %v743, %v945
      %v962 = vadd.f32 %v744, %v946
      %v963 = vadd.f32 %v745, %v947
      %v964 = vadd.f32 %v746, %v948
      %s965 = scalar_lea.vmem %s3, 256
      %v966 = vld [vmem:[%s965] sm:$0xff]
      %v967 = vld [vmem:[%s965 + $0x8] sm:$0xff]
      %v968 = vld [vmem:[%s965 + $0x10] sm:$0xff]
      %v969 = vld [vmem:[%s965 + $0x18] sm:$0xff]
      %v970 = vld [vmem:[%s965 + $0x20] sm:$0xff]
      %v971 = vld [vmem:[%s965 + $0x28] sm:$0xff]
      %v972 = vld [vmem:[%s965 + $0x30] sm:$0xff]
      %v973 = vld [vmem:[%s965 + $0x38] sm:$0xff]
      %v974 = vld [vmem:[%s965 + $0x40] sm:$0xff]
      %v975 = vld [vmem:[%s965 + $0x48] sm:$0xff]
      %v976 = vld [vmem:[%s965 + $0x50] sm:$0xff]
      %v977 = vld [vmem:[%s965 + $0x58] sm:$0xff]
      %v978 = vld [vmem:[%s965 + $0x60] sm:$0xff]
      %v979 = vld [vmem:[%s965 + $0x68] sm:$0xff]
      %v980 = vld [vmem:[%s965 + $0x70] sm:$0xff]
      %v981 = vld [vmem:[%s965 + $0x78] sm:$0xff]
      %s982 = scalar_lea.vmem %s4, 2
      %v983 = vld [vmem:[%s982] sm:$0x1]
      %v985 = vlaneseq
      %v986 = vshrl.u32 %v985, 7
      %v987 = vsub.s32 0, %v986
      %v988 = vrot.slane %v983, %v987
      %990 = vmatprep.subr.mxu0 0.0
      %991 = vmatpush1.msra.mxu0 %v981
      %992 = vmatprep.subr.mxu0 0.0
      %993 = vmatpush1.msra.mxu0 %v980
      %994 = vmatprep.subr.mxu0 0.0
      %995 = vmatpush1.msra.mxu0 %v979
      %996 = vmatprep.subr.mxu0 0.0
      %997 = vmatpush1.msra.mxu0 %v978
      %998 = vmatprep.subr.mxu0 0.0
      %999 = vmatpush1.msra.mxu0 %v977
      %1000 = vmatprep.subr.mxu0 0.0
      %1001 = vmatpush1.msra.mxu0 %v976
      %1002 = vmatprep.subr.mxu0 0.0
      %1003 = vmatpush1.msra.mxu0 %v975
      %1004 = vmatprep.subr.mxu0 0.0
      %1005 = vmatpush1.msra.mxu0 %v974
      %1006 = vmatprep.subr.mxu0 0.0
      %1007 = vmatpush1.msra.mxu0 %v973
      %1008 = vmatprep.subr.mxu0 0.0
      %1009 = vmatpush1.msra.mxu0 %v972
      %1010 = vmatprep.subr.mxu0 0.0
      %1011 = vmatpush1.msra.mxu0 %v971
      %1012 = vmatprep.subr.mxu0 0.0
      %1013 = vmatpush1.msra.mxu0 %v970
      %1014 = vmatprep.subr.mxu0 0.0
      %1015 = vmatpush1.msra.mxu0 %v969
      %1016 = vmatprep.subr.mxu0 0.0
      %1017 = vmatpush1.msra.mxu0 %v968
      %1018 = vmatprep.subr.mxu0 0.0
      %1019 = vmatpush1.msra.mxu0 %v967
      %1020 = vmatprep.subr.mxu0 0.0
      %1021 = vmatpush1.msra.mxu0 %v966
      %1022 = vmatprep.subr.mxu0 0.0
      %1023 = vmatpush2.msra.mxu0 0.0
      %1024 = vmatprep.subr.mxu0 0.0
      %1025 = vmatpush2.msra.mxu0 0.0
      %1026 = vmatprep.subr.mxu0 0.0
      %1027 = vmatpush2.msra.mxu0 0.0
      %1028 = vmatprep.subr.mxu0 0.0
      %1029 = vmatpush2.msra.mxu0 0.0
      %1030 = vmatprep.subr.mxu0 0.0
      %1031 = vmatpush2.msra.mxu0 0.0
      %1032 = vmatprep.subr.mxu0 0.0
      %1033 = vmatpush2.msra.mxu0 0.0
      %1034 = vmatprep.subr.mxu0 0.0
      %1035 = vmatpush2.msra.mxu0 0.0
      %1036 = vmatprep.subr.mxu0 0.0
      %1037 = vmatpush2.msra.mxu0 0.0
      %1038 = vmatprep.subr.mxu0 0.0
      %1039 = vmatpush2.msra.mxu0 0.0
      %1040 = vmatprep.subr.mxu0 0.0
      %1041 = vmatpush2.msra.mxu0 0.0
      %1042 = vmatprep.subr.mxu0 0.0
      %1043 = vmatpush2.msra.mxu0 0.0
      %1044 = vmatprep.subr.mxu0 0.0
      %1045 = vmatpush2.msra.mxu0 0.0
      %1046 = vmatprep.subr.mxu0 0.0
      %1047 = vmatpush2.msra.mxu0 0.0
      %1048 = vmatprep.subr.mxu0 0.0
      %1049 = vmatpush2.msra.mxu0 0.0
      %1050 = vmatprep.subr.mxu0 0.0
      %1051 = vmatpush2.msra.mxu0 0.0
      %1052 = vmatprep.subr.mxu0 0.0
      %1053 = vmatpush2.msra.mxu0 0.0
      %1054 = vmatprep.mubr.f32.mxu0 0.0
      %1055 = vmatmul.mubr.f32.gmra.mxu0 %v949
      %v1056 = vpop.f32.mrf.mxu0
      %v1057 = vadd.f32 %v988, %v1056
      %v1058 = vpop.f32.mrf.mxu0
      %1059 = vmatprep.mubr.f32.mxu0 0.0
      %1060 = vmatmul.mubr.f32.gmra.mxu0 %v950
      %v1061 = vpop.f32.mrf.mxu0
      %v1062 = vadd.f32 %v988, %v1061
      %v1063 = vpop.f32.mrf.mxu0
      %1064 = vmatprep.mubr.f32.mxu0 0.0
      %1065 = vmatmul.mubr.f32.gmra.mxu0 %v951
      %v1066 = vpop.f32.mrf.mxu0
      %v1067 = vadd.f32 %v988, %v1066
      %v1068 = vpop.f32.mrf.mxu0
      %1069 = vmatprep.mubr.f32.mxu0 0.0
      %1070 = vmatmul.mubr.f32.gmra.mxu0 %v952
      %v1071 = vpop.f32.mrf.mxu0
      %v1072 = vadd.f32 %v988, %v1071
      %v1073 = vpop.f32.mrf.mxu0
      %1074 = vmatprep.mubr.f32.mxu0 0.0
      %1075 = vmatmul.mubr.f32.gmra.mxu0 %v953
      %v1076 = vpop.f32.mrf.mxu0
      %v1077 = vadd.f32 %v988, %v1076
      %v1078 = vpop.f32.mrf.mxu0
      %1079 = vmatprep.mubr.f32.mxu0 0.0
      %1080 = vmatmul.mubr.f32.gmra.mxu0 %v954
      %v1081 = vpop.f32.mrf.mxu0
      %v1082 = vadd.f32 %v988, %v1081
      %v1083 = vpop.f32.mrf.mxu0
      %1084 = vmatprep.mubr.f32.mxu0 0.0
      %1085 = vmatmul.mubr.f32.gmra.mxu0 %v955
      %v1086 = vpop.f32.mrf.mxu0
      %v1087 = vadd.f32 %v988, %v1086
      %v1088 = vpop.f32.mrf.mxu0
      %1089 = vmatprep.mubr.f32.mxu0 0.0
      %1090 = vmatmul.mubr.f32.gmra.mxu0 %v956
      %v1091 = vpop.f32.mrf.mxu0
      %v1092 = vadd.f32 %v988, %v1091
      %v1093 = vpop.f32.mrf.mxu0
      %1094 = vmatprep.mubr.f32.mxu0 0.0
      %1095 = vmatmul.mubr.f32.gmra.mxu0 %v957
      %v1096 = vpop.f32.mrf.mxu0
      %v1097 = vadd.f32 %v988, %v1096
      %v1098 = vpop.f32.mrf.mxu0
      %1099 = vmatprep.mubr.f32.mxu0 0.0
      %1100 = vmatmul.mubr.f32.gmra.mxu0 %v958
      %v1101 = vpop.f32.mrf.mxu0
      %v1102 = vadd.f32 %v988, %v1101
      %v1103 = vpop.f32.mrf.mxu0
      %1104 = vmatprep.mubr.f32.mxu0 0.0
      %1105 = vmatmul.mubr.f32.gmra.mxu0 %v959
      %v1106 = vpop.f32.mrf.mxu0
      %v1107 = vadd.f32 %v988, %v1106
      %v1108 = vpop.f32.mrf.mxu0
      %1109 = vmatprep.mubr.f32.mxu0 0.0
      %1110 = vmatmul.mubr.f32.gmra.mxu0 %v960
      %v1111 = vpop.f32.mrf.mxu0
      %v1112 = vadd.f32 %v988, %v1111
      %v1113 = vpop.f32.mrf.mxu0
      %1114 = vmatprep.mubr.f32.mxu0 0.0
      %1115 = vmatmul.mubr.f32.gmra.mxu0 %v961
      %v1116 = vpop.f32.mrf.mxu0
      %v1117 = vadd.f32 %v988, %v1116
      %v1118 = vpop.f32.mrf.mxu0
      %1119 = vmatprep.mubr.f32.mxu0 0.0
      %1120 = vmatmul.mubr.f32.gmra.mxu0 %v962
      %v1121 = vpop.f32.mrf.mxu0
      %v1122 = vadd.f32 %v988, %v1121
      %v1123 = vpop.f32.mrf.mxu0
      %1124 = vmatprep.mubr.f32.mxu0 0.0
      %1125 = vmatmul.mubr.f32.gmra.mxu0 %v963
      %v1126 = vpop.f32.mrf.mxu0
      %v1127 = vadd.f32 %v988, %v1126
      %v1128 = vpop.f32.mrf.mxu0
      %1129 = vmatprep.mubr.f32.mxu0 0.0
      %1130 = vmatmul.mubr.f32.gmra.mxu0 %v964
      %v1131 = vpop.f32.mrf.mxu0
      %v1132 = vadd.f32 %v988, %v1131
      %v1133 = vpop.f32.mrf.mxu0
      %1134 = vdwg.mxu0
      %v1135 = vmul.f32 %v1057, 0.1
      %v1136 = vmul.f32 %v1062, 0.1
      %v1137 = vmul.f32 %v1067, 0.1
      %v1138 = vmul.f32 %v1072, 0.1
      %v1139 = vmul.f32 %v1077, 0.1
      %v1140 = vmul.f32 %v1082, 0.1
      %v1141 = vmul.f32 %v1087, 0.1
      %v1142 = vmul.f32 %v1092, 0.1
      %v1143 = vmul.f32 %v1097, 0.1
      %v1144 = vmul.f32 %v1102, 0.1
      %v1145 = vmul.f32 %v1107, 0.1
      %v1146 = vmul.f32 %v1112, 0.1
      %v1147 = vmul.f32 %v1117, 0.1
      %v1148 = vmul.f32 %v1122, 0.1
      %v1149 = vmul.f32 %v1127, 0.1
      %v1150 = vmul.f32 %v1132, 0.1
      %v1151 = vmax.f32 %v1057, %v1135
      %v1152 = vmax.f32 %v1062, %v1136
      %v1153 = vmax.f32 %v1067, %v1137
      %v1154 = vmax.f32 %v1072, %v1138
      %v1155 = vmax.f32 %v1077, %v1139
      %v1156 = vmax.f32 %v1082, %v1140
      %v1157 = vmax.f32 %v1087, %v1141
      %v1158 = vmax.f32 %v1092, %v1142
      %v1159 = vmax.f32 %v1097, %v1143
      %v1160 = vmax.f32 %v1102, %v1144
      %v1161 = vmax.f32 %v1107, %v1145
      %v1162 = vmax.f32 %v1112, %v1146
      %v1163 = vmax.f32 %v1117, %v1147
      %v1164 = vmax.f32 %v1122, %v1148
      %v1165 = vmax.f32 %v1127, %v1149
      %v1166 = vmax.f32 %v1132, %v1150
      %v1167 = vadd.f32 %v949, %v1151
      %v1168 = vadd.f32 %v950, %v1152
      %v1169 = vadd.f32 %v951, %v1153
      %v1170 = vadd.f32 %v952, %v1154
      %v1171 = vadd.f32 %v953, %v1155
      %v1172 = vadd.f32 %v954, %v1156
      %v1173 = vadd.f32 %v955, %v1157
      %v1174 = vadd.f32 %v956, %v1158
      %v1175 = vadd.f32 %v957, %v1159
      %v1176 = vadd.f32 %v958, %v1160
      %v1177 = vadd.f32 %v959, %v1161
      %v1178 = vadd.f32 %v960, %v1162
      %v1179 = vadd.f32 %v961, %v1163
      %v1180 = vadd.f32 %v962, %v1164
      %v1181 = vadd.f32 %v963, %v1165
      %v1182 = vadd.f32 %v964, %v1166
      %s1183 = scalar_lea.vmem %s3, 384
      %v1184 = vld [vmem:[%s1183] sm:$0xff]
      %v1185 = vld [vmem:[%s1183 + $0x8] sm:$0xff]
      %v1186 = vld [vmem:[%s1183 + $0x10] sm:$0xff]
      %v1187 = vld [vmem:[%s1183 + $0x18] sm:$0xff]
      %v1188 = vld [vmem:[%s1183 + $0x20] sm:$0xff]
      %v1189 = vld [vmem:[%s1183 + $0x28] sm:$0xff]
      %v1190 = vld [vmem:[%s1183 + $0x30] sm:$0xff]
      %v1191 = vld [vmem:[%s1183 + $0x38] sm:$0xff]
      %v1192 = vld [vmem:[%s1183 + $0x40] sm:$0xff]
      %v1193 = vld [vmem:[%s1183 + $0x48] sm:$0xff]
      %v1194 = vld [vmem:[%s1183 + $0x50] sm:$0xff]
      %v1195 = vld [vmem:[%s1183 + $0x58] sm:$0xff]
      %v1196 = vld [vmem:[%s1183 + $0x60] sm:$0xff]
      %v1197 = vld [vmem:[%s1183 + $0x68] sm:$0xff]
      %v1198 = vld [vmem:[%s1183 + $0x70] sm:$0xff]
      %v1199 = vld [vmem:[%s1183 + $0x78] sm:$0xff]
      %s1200 = scalar_lea.vmem %s4, 3
      %v1201 = vld [vmem:[%s1200] sm:$0x1]
      %v1203 = vlaneseq
      %v1204 = vshrl.u32 %v1203, 7
      %v1205 = vsub.s32 0, %v1204
      %v1206 = vrot.slane %v1201, %v1205
      %1208 = vmatprep.subr.mxu0 0.0
      %1209 = vmatpush1.msra.mxu0 %v1199
      %1210 = vmatprep.subr.mxu0 0.0
      %1211 = vmatpush1.msra.mxu0 %v1198
      %1212 = vmatprep.subr.mxu0 0.0
      %1213 = vmatpush1.msra.mxu0 %v1197
      %1214 = vmatprep.subr.mxu0 0.0
      %1215 = vmatpush1.msra.mxu0 %v1196
      %1216 = vmatprep.subr.mxu0 0.0
      %1217 = vmatpush1.msra.mxu0 %v1195
      %1218 = vmatprep.subr.mxu0 0.0
      %1219 = vmatpush1.msra.mxu0 %v1194
      %1220 = vmatprep.subr.mxu0 0.0
      %1221 = vmatpush1.msra.mxu0 %v1193
      %1222 = vmatprep.subr.mxu0 0.0
      %1223 = vmatpush1.msra.mxu0 %v1192
      %1224 = vmatprep.subr.mxu0 0.0
      %1225 = vmatpush1.msra.mxu0 %v1191
      %1226 = vmatprep.subr.mxu0 0.0
      %1227 = vmatpush1.msra.mxu0 %v1190
      %1228 = vmatprep.subr.mxu0 0.0
      %1229 = vmatpush1.msra.mxu0 %v1189
      %1230 = vmatprep.subr.mxu0 0.0
      %1231 = vmatpush1.msra.mxu0 %v1188
      %1232 = vmatprep.subr.mxu0 0.0
      %1233 = vmatpush1.msra.mxu0 %v1187
      %1234 = vmatprep.subr.mxu0 0.0
      %1235 = vmatpush1.msra.mxu0 %v1186
      %1236 = vmatprep.subr.mxu0 0.0
      %1237 = vmatpush1.msra.mxu0 %v1185
      %1238 = vmatprep.subr.mxu0 0.0
      %1239 = vmatpush1.msra.mxu0 %v1184
      %1240 = vmatprep.subr.mxu0 0.0
      %1241 = vmatpush2.msra.mxu0 0.0
      %1242 = vmatprep.subr.mxu0 0.0
      %1243 = vmatpush2.msra.mxu0 0.0
      %1244 = vmatprep.subr.mxu0 0.0
      %1245 = vmatpush2.msra.mxu0 0.0
      %1246 = vmatprep.subr.mxu0 0.0
      %1247 = vmatpush2.msra.mxu0 0.0
      %1248 = vmatprep.subr.mxu0 0.0
      %1249 = vmatpush2.msra.mxu0 0.0
      %1250 = vmatprep.subr.mxu0 0.0
      %1251 = vmatpush2.msra.mxu0 0.0
      %1252 = vmatprep.subr.mxu0 0.0
      %1253 = vmatpush2.msra.mxu0 0.0
      %1254 = vmatprep.subr.mxu0 0.0
      %1255 = vmatpush2.msra.mxu0 0.0
      %1256 = vmatprep.subr.mxu0 0.0
      %1257 = vmatpush2.msra.mxu0 0.0
      %1258 = vmatprep.subr.mxu0 0.0
      %1259 = vmatpush2.msra.mxu0 0.0
      %1260 = vmatprep.subr.mxu0 0.0
      %1261 = vmatpush2.msra.mxu0 0.0
      %1262 = vmatprep.subr.mxu0 0.0
      %1263 = vmatpush2.msra.mxu0 0.0
      %1264 = vmatprep.subr.mxu0 0.0
      %1265 = vmatpush2.msra.mxu0 0.0
      %1266 = vmatprep.subr.mxu0 0.0
      %1267 = vmatpush2.msra.mxu0 0.0
      %1268 = vmatprep.subr.mxu0 0.0
      %1269 = vmatpush2.msra.mxu0 0.0
      %1270 = vmatprep.subr.mxu0 0.0
      %1271 = vmatpush2.msra.mxu0 0.0
      %1272 = vmatprep.mubr.f32.mxu0 0.0
      %1273 = vmatmul.mubr.f32.gmra.mxu0 %v1167
      %v1274 = vpop.f32.mrf.mxu0
      %v1275 = vadd.f32 %v1206, %v1274
      %v1276 = vpop.f32.mrf.mxu0
      %1277 = vmatprep.mubr.f32.mxu0 0.0
      %1278 = vmatmul.mubr.f32.gmra.mxu0 %v1168
      %v1279 = vpop.f32.mrf.mxu0
      %v1280 = vadd.f32 %v1206, %v1279
      %v1281 = vpop.f32.mrf.mxu0
      %1282 = vmatprep.mubr.f32.mxu0 0.0
      %1283 = vmatmul.mubr.f32.gmra.mxu0 %v1169
      %v1284 = vpop.f32.mrf.mxu0
      %v1285 = vadd.f32 %v1206, %v1284
      %v1286 = vpop.f32.mrf.mxu0
      %1287 = vmatprep.mubr.f32.mxu0 0.0
      %1288 = vmatmul.mubr.f32.gmra.mxu0 %v1170
      %v1289 = vpop.f32.mrf.mxu0
      %v1290 = vadd.f32 %v1206, %v1289
      %v1291 = vpop.f32.mrf.mxu0
      %1292 = vmatprep.mubr.f32.mxu0 0.0
      %1293 = vmatmul.mubr.f32.gmra.mxu0 %v1171
      %v1294 = vpop.f32.mrf.mxu0
      %v1295 = vadd.f32 %v1206, %v1294
      %v1296 = vpop.f32.mrf.mxu0
      %1297 = vmatprep.mubr.f32.mxu0 0.0
      %1298 = vmatmul.mubr.f32.gmra.mxu0 %v1172
      %v1299 = vpop.f32.mrf.mxu0
      %v1300 = vadd.f32 %v1206, %v1299
      %v1301 = vpop.f32.mrf.mxu0
      %1302 = vmatprep.mubr.f32.mxu0 0.0
      %1303 = vmatmul.mubr.f32.gmra.mxu0 %v1173
      %v1304 = vpop.f32.mrf.mxu0
      %v1305 = vadd.f32 %v1206, %v1304
      %v1306 = vpop.f32.mrf.mxu0
      %1307 = vmatprep.mubr.f32.mxu0 0.0
      %1308 = vmatmul.mubr.f32.gmra.mxu0 %v1174
      %v1309 = vpop.f32.mrf.mxu0
      %v1310 = vadd.f32 %v1206, %v1309
      %v1311 = vpop.f32.mrf.mxu0
      %1312 = vmatprep.mubr.f32.mxu0 0.0
      %1313 = vmatmul.mubr.f32.gmra.mxu0 %v1175
      %v1314 = vpop.f32.mrf.mxu0
      %v1315 = vadd.f32 %v1206, %v1314
      %v1316 = vpop.f32.mrf.mxu0
      %1317 = vmatprep.mubr.f32.mxu0 0.0
      %1318 = vmatmul.mubr.f32.gmra.mxu0 %v1176
      %v1319 = vpop.f32.mrf.mxu0
      %v1320 = vadd.f32 %v1206, %v1319
      %v1321 = vpop.f32.mrf.mxu0
      %1322 = vmatprep.mubr.f32.mxu0 0.0
      %1323 = vmatmul.mubr.f32.gmra.mxu0 %v1177
      %v1324 = vpop.f32.mrf.mxu0
      %v1325 = vadd.f32 %v1206, %v1324
      %v1326 = vpop.f32.mrf.mxu0
      %1327 = vmatprep.mubr.f32.mxu0 0.0
      %1328 = vmatmul.mubr.f32.gmra.mxu0 %v1178
      %v1329 = vpop.f32.mrf.mxu0
      %v1330 = vadd.f32 %v1206, %v1329
      %v1331 = vpop.f32.mrf.mxu0
      %1332 = vmatprep.mubr.f32.mxu0 0.0
      %1333 = vmatmul.mubr.f32.gmra.mxu0 %v1179
      %v1334 = vpop.f32.mrf.mxu0
      %v1335 = vadd.f32 %v1206, %v1334
      %v1336 = vpop.f32.mrf.mxu0
      %1337 = vmatprep.mubr.f32.mxu0 0.0
      %1338 = vmatmul.mubr.f32.gmra.mxu0 %v1180
      %v1339 = vpop.f32.mrf.mxu0
      %v1340 = vadd.f32 %v1206, %v1339
      %v1341 = vpop.f32.mrf.mxu0
      %1342 = vmatprep.mubr.f32.mxu0 0.0
      %1343 = vmatmul.mubr.f32.gmra.mxu0 %v1181
      %v1344 = vpop.f32.mrf.mxu0
      %v1345 = vadd.f32 %v1206, %v1344
      %v1346 = vpop.f32.mrf.mxu0
      %1347 = vmatprep.mubr.f32.mxu0 0.0
      %1348 = vmatmul.mubr.f32.gmra.mxu0 %v1182
      %v1349 = vpop.f32.mrf.mxu0
      %v1350 = vadd.f32 %v1206, %v1349
      %v1351 = vpop.f32.mrf.mxu0
      %1352 = vdwg.mxu0
      %v1353 = vmul.f32 %v1275, 0.1
      %v1354 = vmul.f32 %v1280, 0.1
      %v1355 = vmul.f32 %v1285, 0.1
      %v1356 = vmul.f32 %v1290, 0.1
      %v1357 = vmul.f32 %v1295, 0.1
      %v1358 = vmul.f32 %v1300, 0.1
      %v1359 = vmul.f32 %v1305, 0.1
      %v1360 = vmul.f32 %v1310, 0.1
      %v1361 = vmul.f32 %v1315, 0.1
      %v1362 = vmul.f32 %v1320, 0.1
      %v1363 = vmul.f32 %v1325, 0.1
      %v1364 = vmul.f32 %v1330, 0.1
      %v1365 = vmul.f32 %v1335, 0.1
      %v1366 = vmul.f32 %v1340, 0.1
      %v1367 = vmul.f32 %v1345, 0.1
      %v1368 = vmul.f32 %v1350, 0.1
      %v1369 = vmax.f32 %v1275, %v1353
      %v1370 = vmax.f32 %v1280, %v1354
      %v1371 = vmax.f32 %v1285, %v1355
      %v1372 = vmax.f32 %v1290, %v1356
      %v1373 = vmax.f32 %v1295, %v1357
      %v1374 = vmax.f32 %v1300, %v1358
      %v1375 = vmax.f32 %v1305, %v1359
      %v1376 = vmax.f32 %v1310, %v1360
      %v1377 = vmax.f32 %v1315, %v1361
      %v1378 = vmax.f32 %v1320, %v1362
      %v1379 = vmax.f32 %v1325, %v1363
      %v1380 = vmax.f32 %v1330, %v1364
      %v1381 = vmax.f32 %v1335, %v1365
      %v1382 = vmax.f32 %v1340, %v1366
      %v1383 = vmax.f32 %v1345, %v1367
      %v1384 = vmax.f32 %v1350, %v1368
      %v1385 = vadd.f32 %v1167, %v1369
      %v1386 = vadd.f32 %v1168, %v1370
      %v1387 = vadd.f32 %v1169, %v1371
      %v1388 = vadd.f32 %v1170, %v1372
      %v1389 = vadd.f32 %v1171, %v1373
      %v1390 = vadd.f32 %v1172, %v1374
      %v1391 = vadd.f32 %v1173, %v1375
      %v1392 = vadd.f32 %v1174, %v1376
      %v1393 = vadd.f32 %v1175, %v1377
      %v1394 = vadd.f32 %v1176, %v1378
      %v1395 = vadd.f32 %v1177, %v1379
      %v1396 = vadd.f32 %v1178, %v1380
      %v1397 = vadd.f32 %v1179, %v1381
      %v1398 = vadd.f32 %v1180, %v1382
      %v1399 = vadd.f32 %v1181, %v1383
      %v1400 = vadd.f32 %v1182, %v1384
      %v1401 = vld [vmem:[%s5] sm:$0xff]
      %v1402 = vld [vmem:[#allocation2] sm:$0x1]
      %v1404 = vlaneseq
      %v1405 = vshrl.u32 %v1404, 7
      %v1406 = vsub.s32 0, %v1405
      %v1407 = vrot.slane %v1402, %v1406
      %1408 = vset.pattern.permute.xlu0 0
      %1409 = vperm.xlu0 %1408, %v1407
      %v1410 = vpop.permute.xlu0 %1409
      %1412 = vmatprep.subr.mxu0 0.0
      %1413 = vmatpush1.xpose.msra.mxu0 %v1400
      %1414 = vmatprep.subr.mxu0 0.0
      %1415 = vmatpush1.xpose.msra.mxu0 %v1399
      %1416 = vmatprep.subr.mxu0 0.0
      %1417 = vmatpush1.xpose.msra.mxu0 %v1398
      %1418 = vmatprep.subr.mxu0 0.0
      %1419 = vmatpush1.xpose.msra.mxu0 %v1397
      %1420 = vmatprep.subr.mxu0 0.0
      %1421 = vmatpush1.xpose.msra.mxu0 %v1396
      %1422 = vmatprep.subr.mxu0 0.0
      %1423 = vmatpush1.xpose.msra.mxu0 %v1395
      %1424 = vmatprep.subr.mxu0 0.0
      %1425 = vmatpush1.xpose.msra.mxu0 %v1394
      %1426 = vmatprep.subr.mxu0 0.0
      %1427 = vmatpush1.xpose.msra.mxu0 %v1393
      %1428 = vmatprep.subr.mxu0 0.0
      %1429 = vmatpush1.xpose.msra.mxu0 %v1392
      %1430 = vmatprep.subr.mxu0 0.0
      %1431 = vmatpush1.xpose.msra.mxu0 %v1391
      %1432 = vmatprep.subr.mxu0 0.0
      %1433 = vmatpush1.xpose.msra.mxu0 %v1390
      %1434 = vmatprep.subr.mxu0 0.0
      %1435 = vmatpush1.xpose.msra.mxu0 %v1389
      %1436 = vmatprep.subr.mxu0 0.0
      %1437 = vmatpush1.xpose.msra.mxu0 %v1388
      %1438 = vmatprep.subr.mxu0 0.0
      %1439 = vmatpush1.xpose.msra.mxu0 %v1387
      %1440 = vmatprep.subr.mxu0 0.0
      %1441 = vmatpush1.xpose.msra.mxu0 %v1386
      %1442 = vmatprep.subr.mxu0 0.0
      %1443 = vmatpush1.xpose.msra.mxu0 %v1385
      %1444 = vmatprep.subr.mxu0 0.0
      %1445 = vmatpush2.xpose.msra.mxu0 0.0
      %1446 = vmatprep.subr.mxu0 0.0
      %1447 = vmatpush2.xpose.msra.mxu0 0.0
      %1448 = vmatprep.subr.mxu0 0.0
      %1449 = vmatpush2.xpose.msra.mxu0 0.0
      %1450 = vmatprep.subr.mxu0 0.0
      %1451 = vmatpush2.xpose.msra.mxu0 0.0
      %1452 = vmatprep.subr.mxu0 0.0
      %1453 = vmatpush2.xpose.msra.mxu0 0.0
      %1454 = vmatprep.subr.mxu0 0.0
      %1455 = vmatpush2.xpose.msra.mxu0 0.0
      %1456 = vmatprep.subr.mxu0 0.0
      %1457 = vmatpush2.xpose.msra.mxu0 0.0
      %1458 = vmatprep.subr.mxu0 0.0
      %1459 = vmatpush2.xpose.msra.mxu0 0.0
      %1460 = vmatprep.subr.mxu0 0.0
      %1461 = vmatpush2.xpose.msra.mxu0 0.0
      %1462 = vmatprep.subr.mxu0 0.0
      %1463 = vmatpush2.xpose.msra.mxu0 0.0
      %1464 = vmatprep.subr.mxu0 0.0
      %1465 = vmatpush2.xpose.msra.mxu0 0.0
      %1466 = vmatprep.subr.mxu0 0.0
      %1467 = vmatpush2.xpose.msra.mxu0 0.0
      %1468 = vmatprep.subr.mxu0 0.0
      %1469 = vmatpush2.xpose.msra.mxu0 0.0
      %1470 = vmatprep.subr.mxu0 0.0
      %1471 = vmatpush2.xpose.msra.mxu0 0.0
      %1472 = vmatprep.subr.mxu0 0.0
      %1473 = vmatpush2.xpose.msra.mxu0 0.0
      %1474 = vmatprep.subr.mxu0 0.0
      %1475 = vmatpush2.xpose.msra.mxu0 0.0
      %1476 = vmatprep.mubr.f32.mxu0 0.0
      %1477 = vmatmul.mubr.f32.gmra.mxu0 %v1401
      %v1478 = vpop.f32.mrf.mxu0
      %v1479 = vadd.f32 %v1410, %v1478
      %v1480 = vpop.f32.mrf.mxu0
      %1481 = vdwg.mxu0
      %1482 = vst [vmem:[%s280] sm:$0xff] %v1479
      %p1483 = scmp.lt.s32.totalorder %s20, 1
      %s1484 = scalar_select %p1483, %s20, 1
      %s1485 = smul.addr %s1484, 8
      %s1486 = scalar_lea.vmem %s7, %s1485
      // Predicated region
      $region49: #{prometheus_forward.1} parent=47 // pred_check
        %p1487 = pneg %p190
      $region50: #{prometheus_forward.1} parent=47 // pred_check_branch
        %1489 = sbr.rel (%p1487) target = $region52
      $region51: #{prometheus_forward.1} parent=47 // pred_region
        _
      $region52: #{prometheus_forward.1} parent=47 // pred_fallthru
        _
    $region48: #{prometheus_forward.1} parent=5 // pred_fallthru
      _
    %p1490 = scmp.le.s32.totalorder 2, %s15
    // Predicated region
    $region53: #{prometheus_forward.1} parent=5 // pred_check
      %p1491 = pneg %p1490
    $region54: #{prometheus_forward.1} parent=5 // pred_check_branch
      %1493 = sbr.rel (%p1491) target = $region56
    $region55: #{prometheus_forward.1} parent=5 // pred_region
      %s1494 = ssub.s32 %s15, 2
      // Predicated region
      $region57: #{prometheus_forward.1} parent=55 // pred_check
        %p1495 = pneg %p196
      $region58: #{prometheus_forward.1} parent=55 // pred_check_branch
        %1497 = sbr.rel (%p1495) target = $region60
      $region59: #{prometheus_forward.1} parent=55 // pred_region
        %p1498 = scmp.lt.s32.totalorder %s21, 1
        %s1499 = scalar_select %p1498, %s21, 1
        %s1500 = smul.addr %s1499, 8
        %s1501 = scalar_lea.vmem %s7, %s1500
      $region60: #{prometheus_forward.1} parent=55 // pred_fallthru
        _
    $region56: #{prometheus_forward.1} parent=5 // pred_fallthru
      _
  $region6: #{prometheus_forward.1} parent=0 // loop_footer
    %s19 = sadd.s32 1, %s15
  $region7: #{prometheus_forward.1} parent=0 // loop_footer_branch
    %14 = sbr.rel target = $region3
  $region8: #{prometheus_forward.1} parent=0 // loop_exit
    _

</llo_original>
